<compile_context>
chip_gen: v7x
topology: tpu7x:2x2x1
jax: 0.10.0
libtpu: 0.0.40
codegen_flags: <defaults>
</compile_context>

<pallas_src>
import math

import numpy as np
import jax
import jax.numpy as jnp
from jax.experimental import pallas as pl
from jax.experimental.pallas import tpu as pltpu

EPS = 1e-8  # torch.cosine_similarity default eps


# ---------------------------------------------------------------------------
# Pallas kernel: batched pairwise cosine similarity
#   out[g, i, j] = (a_gi . b_gj) * rsqrt(max(||a_gi||^2 * ||b_gj||^2, eps^2))
# One grid step = one batch item (RGB or SAR), whole matrix in a single block.
# ---------------------------------------------------------------------------
def _cos_sim_batched_kernel(a_ref, b_ref, o_ref):
    a = a_ref[...]                                # (Ep, C) f32 (leading dim squeezed)
    b = b_ref[...]                                # (Fp, C) f32
    # A @ B^T on the MXU, f32 accumulation.
    dot = jax.lax.dot_general(
        a, b, (((1,), (1,)), ((), ())), preferred_element_type=jnp.float32
    )                                             # (Ep, Fp)
    # Row norms computed once per batch item (grid collapsed -> no recompute).
    na2 = jnp.sum(a * a, axis=1, keepdims=True)   # (Ep, 1)
    nb2 = jnp.sum(b * b, axis=1)[None, :]         # (1, Fp)
    # Exact rsqrt (EUP) + VALU multiply; clamp on the *product* of squared norms
    # so zero / padding rows behave exactly like torch.cosine_similarity.
    inv = jax.lax.rsqrt(jnp.maximum(na2 * nb2, EPS * EPS))
    o_ref[...] = (dot * inv).astype(o_ref.dtype)


def fused_pairwise_cosine_similarity(anch, tar):
    """anch: (B, E, C), tar: (B, F, C)  ->  (B, E, F) f32 cosine-sim matrices.

    Single pallas_call; grid is the batch axis only (parallel -> 2 TCs on v7x).
    """
    B, E, C = anch.shape
    B2, F_, C2 = tar.shape
    assert B == B2 and C == C2

    a = anch if anch.dtype == jnp.float32 else anch.astype(jnp.float32)
    b = tar if tar.dtype == jnp.float32 else tar.astype(jnp.float32)

    # Pad only when necessary (production shapes 512 / 256 need no padding).
    Ep = math.ceil(E / 8) * 8
    Fp = math.ceil(F_ / 128) * 128
    if Ep != E:
        a = jnp.pad(a, ((0, 0), (0, Ep - E), (0, 0)))
    if Fp != F_:
        b = jnp.pad(b, ((0, 0), (0, Fp - F_), (0, 0)))

    out = pl.pallas_call(
        _cos_sim_batched_kernel,
        out_shape=jax.ShapeDtypeStruct((B, Ep, Fp), jnp.float32),
        grid_spec=pltpu.PrefetchScalarGridSpec(
            num_scalar_prefetch=0,
            grid=(B,),
            in_specs=[
                pl.BlockSpec((None, Ep, C), lambda g: (g, 0, 0)),
                pl.BlockSpec((None, Fp, C), lambda g: (g, 0, 0)),
            ],
            # Full-width, lane-dense output block -> unmasked full-width stores.
            out_specs=pl.BlockSpec((None, Ep, Fp), lambda g: (g, 0, 0)),
        ),
        compiler_params=pltpu.CompilerParams(
            dimension_semantics=("parallel",)
        ),
    )(a, b)

    if Ep != E or Fp != F_:
        out = out[:, :E, :F_]
    return out


# jitted gather + stack + fused-similarity path (keeps the pallas dispatch and
# the four gathers inside one XLA program; retraces only if E changes branch).
@jax.jit
def _gather_and_sim(RGB, SAR, edge_index, feat_index):
    anch = jnp.stack([RGB[edge_index], SAR[edge_index]])  # (2, E, C)
    tar = jnp.stack([RGB[feat_index], SAR[feat_index]])   # (2, F, C)
    mats = fused_pairwise_cosine_similarity(anch, tar)
    return mats[0], mats[1]                               # RGB_mat, SAR_mat


# ---------------------------------------------------------------------------
# Glue: bilinear resize (align_corners=True), multinomial w/o replacement
# ---------------------------------------------------------------------------
def bilinear_resize_align_corners(x, out_h, out_w):
    """x: (N, C, Hin, Win) float -> (N, C, out_h, out_w), PyTorch align_corners=True."""
    N, C, Hin, Win = x.shape
    ys = (jnp.arange(out_h, dtype=jnp.float32) * ((Hin - 1) / (out_h - 1))
          if out_h > 1 else jnp.zeros((out_h,), jnp.float32))
    xs = (jnp.arange(out_w, dtype=jnp.float32) * ((Win - 1) / (out_w - 1))
          if out_w > 1 else jnp.zeros((out_w,), jnp.float32))
    y0 = jnp.floor(ys).astype(jnp.int32)
    x0 = jnp.floor(xs).astype(jnp.int32)
    y1 = jnp.minimum(y0 + 1, Hin - 1)
    x1 = jnp.minimum(x0 + 1, Win - 1)
    wy = (ys - y0.astype(jnp.float32))[:, None]      # (out_h, 1)
    wx = (xs - x0.astype(jnp.float32))[None, :]      # (1, out_w)

    rows0 = x[:, :, y0, :]                           # (N, C, out_h, Win)
    rows1 = x[:, :, y1, :]
    top = rows0[:, :, :, x0] * (1.0 - wx) + rows0[:, :, :, x1] * wx
    bot = rows1[:, :, :, x0] * (1.0 - wx) + rows1[:, :, :, x1] * wx
    return top * (1.0 - wy) + bot * wy


def multinomial_without_replacement(key, weights, num):
    """Weighted sampling without replacement (Gumbel top-k); == torch.multinomial
    semantics (distribution), different RNG stream."""
    g = jax.random.gumbel(key, weights.shape, dtype=jnp.float32)
    scores = jnp.where(weights > 0, jnp.log(jnp.maximum(weights, 1e-30)) + g, -jnp.inf)
    _, idx = jax.lax.top_k(scores, num)
    return idx


# ---------------------------------------------------------------------------
# SimMat forward (module has no learnable parameters)
# ---------------------------------------------------------------------------
def simmat_forward(key, RGB_feat, SAR_feat, edge_mask):
    edge_sp = 512
    feat_sp = 256
    N, C, H, W = SAR_feat.shape
    SAR = jnp.transpose(SAR_feat, (0, 2, 3, 1)).reshape(-1, C)
    RGB = jnp.transpose(RGB_feat, (0, 2, 3, 1)).reshape(-1, C)

    valid_mask = (jnp.sum(SAR, axis=1) != 0).astype(jnp.float32)
    feat_weight = jnp.ones((SAR.shape[0],), jnp.float32) * valid_mask

    k_feat, k_edge = jax.random.split(key)
    feat_index = multinomial_without_replacement(k_feat, feat_weight, feat_sp)

    em = bilinear_resize_align_corners(edge_mask.astype(jnp.float32), H, W)
    em = (em > 0.5).astype(jnp.float32)
    em = jnp.transpose(em, (0, 2, 3, 1)).reshape(-1) * valid_mask

    # TODO(synk): host readback + Python branching kept on purpose — the
    # original module's third branch samples a data-dependent NUMBER of anchors
    # (variable output shape), which cannot be expressed with fixed-shape jit.
    em_sum = int(jnp.sum(em))
    if em_sum > edge_sp:
        edge_weight = feat_weight * em
        edge_index = multinomial_without_replacement(k_edge, edge_weight, edge_sp)
    elif em_sum == 0:
        edge_index = multinomial_without_replacement(k_edge, feat_weight, edge_sp)
    else:
        edge_weight = feat_weight * em
        edge_index = multinomial_without_replacement(k_edge, edge_weight, em_sum)

    RGB_mat, SAR_mat = _gather_and_sim(RGB, SAR, edge_index, feat_index)
    return RGB_mat, SAR_mat


# ---------------------------------------------------------------------------
def _cos_sim_reference(anch, tar):
    a = anch.astype(jnp.float32)
    b = tar.astype(jnp.float32)
    dot = a @ b.T
    na2 = jnp.sum(a * a, axis=1, keepdims=True)
    nb2 = jnp.sum(b * b, axis=1, keepdims=True)
    return dot / jnp.sqrt(jnp.maximum(na2 * nb2.T, EPS * EPS))


if __name__ == "__main__":
    key = jax.random.PRNGKey(0)
    k_rgb, k_sar, k_sample = jax.random.split(key, 3)

    # small but representative shapes: N=2, C=32, H=W=32  ->  2048 feature rows
    N, C, H, W = 2, 32, 32, 32
    RGB_feat = jax.random.normal(k_rgb, (N, C, H, W), dtype=jnp.float32)
    SAR_feat = jax.random.normal(k_sar, (N, C, H, W), dtype=jnp.float32)

    # deterministic edge mask at a higher resolution (left half = edges),
    # so that after resize edge_mask.sum() > edge_sp (=512) branch is exercised.
    He, We = 64, 64
    edge_np = np.zeros((N, 1, He, We), dtype=np.float32)
    edge_np[:, :, :, : We // 2] = 1.0
    edge_mask = jnp.asarray(edge_np)

    RGB_mat, SAR_mat = simmat_forward(k_sample, RGB_feat, SAR_feat, edge_mask)
    RGB_mat = jax.block_until_ready(RGB_mat)
    SAR_mat = jax.block_until_ready(SAR_mat)

    # sanity-check the Pallas kernel against a plain-JAX reference
    SAR = jnp.transpose(SAR_feat, (0, 2, 3, 1)).reshape(-1, C)
    RGB = jnp.transpose(RGB_feat, (0, 2, 3, 1)).reshape(-1, C)
    k_feat, k_edge = jax.random.split(k_sample)
    valid_mask = (jnp.sum(SAR, axis=1) != 0).astype(jnp.float32)
    feat_weight = jnp.ones((SAR.shape[0],), jnp.float32) * valid_mask
    feat_index = multinomial_without_replacement(k_feat, feat_weight, 256)
    em = bilinear_resize_align_corners(edge_mask, H, W)
    em = (em > 0.5).astype(jnp.float32)
    em = jnp.transpose(em, (0, 2, 3, 1)).reshape(-1) * valid_mask
    edge_index = multinomial_without_replacement(k_edge, feat_weight * em, 512)

    sar_ref = _cos_sim_reference(SAR[edge_index], SAR[feat_index])
    rgb_ref = _cos_sim_reference(RGB[edge_index], RGB[feat_index])

    assert SAR_mat.shape == (512, 256) and RGB_mat.shape == (512, 256)
    assert np.allclose(np.asarray(SAR_mat), np.asarray(sar_ref), atol=2e-5, rtol=2e-5)
    assert np.allclose(np.asarray(RGB_mat), np.asarray(rgb_ref), atol=2e-5, rtol=2e-5)

    print("KERNEL_OK")
</pallas_src>

<mosaic_0001>
module attributes {stable_mosaic.version = 11 : i64} {
  func.func @_cos_sim_batched_kernel(%arg0: i32, %arg1: memref<1x512x32xf32, #tpu.memory_space<vmem>>, %arg2: memref<1x256x32xf32, #tpu.memory_space<vmem>>, %arg3: memref<1x512x256xf32, #tpu.memory_space<vmem>>) attributes {dimension_semantics = [#tpu.dimension_semantics<parallel>], iteration_bounds = array<i64: 2>, scalar_prefetch = 0 : i64, scratch_operands = 0 : i64, tpu.core_type = #tpu.core_type<tc>, window_params = [{transform_indices = @transform_0, window_bounds = array<i64: 1, 512, 32>}, {transform_indices = @transform_1, window_bounds = array<i64: 1, 256, 32>}, {transform_indices = @transform_2, window_bounds = array<i64: 1, 512, 256>}]} {
    %c0 = arith.constant 0 : index
    %c0_0 = arith.constant 0 : index
    %c0_1 = arith.constant 0 : index
    %0 = vector.load %arg1[%c0, %c0_0, %c0_1] : memref<1x512x32xf32, #tpu.memory_space<vmem>>, vector<1x512x32xf32>
    %1 = vector.shape_cast %0 : vector<1x512x32xf32> to vector<512x32xf32>
    %c0_2 = arith.constant 0 : index
    %c0_3 = arith.constant 0 : index
    %c0_4 = arith.constant 0 : index
    %2 = vector.load %arg2[%c0_2, %c0_3, %c0_4] : memref<1x256x32xf32, #tpu.memory_space<vmem>>, vector<1x256x32xf32>
    %3 = vector.shape_cast %2 : vector<1x256x32xf32> to vector<256x32xf32>
    %cst = arith.constant dense<0.000000e+00> : vector<512x256xf32>
    %4 = tpu.matmul %1, %3, %cst {dimension_numbers = #tpu.dot_dimension_numbers<[1], [1], [0], [0], [0, 0, 1, 0], [], []>} : vector<512x32xf32>, vector<256x32xf32>, vector<512x256xf32> -> vector<512x256xf32>
    %5 = arith.mulf %1, %1 : vector<512x32xf32>
    %cst_5 = arith.constant dense<0.000000e+00> : vector<512xf32>
    %6 = vector.multi_reduction <add>, %5, %cst_5 [1] : vector<512x32xf32> to vector<512xf32>
    %7 = vector.shape_cast %6 : vector<512xf32> to vector<512x1xf32>
    %8 = arith.mulf %3, %3 : vector<256x32xf32>
    %cst_6 = arith.constant dense<0.000000e+00> : vector<256xf32>
    %9 = vector.multi_reduction <add>, %8, %cst_6 [1] : vector<256x32xf32> to vector<256xf32>
    %10 = vector.shape_cast %9 : vector<256xf32> to vector<1x256xf32>
    %11 = vector.broadcast %7 : vector<512x1xf32> to vector<512x256xf32>
    %12 = vector.broadcast %10 : vector<1x256xf32> to vector<512x256xf32>
    %13 = arith.mulf %11, %12 : vector<512x256xf32>
    %cst_7 = arith.constant 1.000000e-16 : f32
    %14 = vector.broadcast %cst_7 : f32 to vector<512x256xf32>
    %15 = arith.maximumf %13, %14 : vector<512x256xf32>
    %16 = math.rsqrt %15 : vector<512x256xf32>
    %17 = arith.mulf %4, %16 : vector<512x256xf32>
    %c0_8 = arith.constant 0 : index
    %c0_9 = arith.constant 0 : index
    %c0_10 = arith.constant 0 : index
    %18 = vector.load %arg3[%c0_8, %c0_9, %c0_10] : memref<1x512x256xf32, #tpu.memory_space<vmem>>, vector<1x512x256xf32>
    %19 = vector.shape_cast %18 : vector<1x512x256xf32> to vector<512x256xf32>
    %20 = vector.shape_cast %17 : vector<512x256xf32> to vector<1x512x256xf32>
    tpu.vector_store %arg3[%c0_8, %c0_9, %c0_10], %20 {strides = array<i32>} : memref<1x512x256xf32, #tpu.memory_space<vmem>>, vector<1x512x256xf32>,
    return
  }
  func.func @transform_0(%arg0: i32) -> (i32, i32, i32) {
    %c0_i32 = arith.constant 0 : i32
    %c0_i32_0 = arith.constant 0 : i32
    %c0_i32_1 = arith.constant 0 : i32
    return %arg0, %c0_i32, %c0_i32_0 : i32, i32, i32
  }
  func.func @transform_1(%arg0: i32) -> (i32, i32, i32) {
    %c0_i32 = arith.constant 0 : i32
    %c0_i32_0 = arith.constant 0 : i32
    %c0_i32_1 = arith.constant 0 : i32
    return %arg0, %c0_i32, %c0_i32_0 : i32, i32, i32
  }
  func.func @transform_2(%arg0: i32) -> (i32, i32, i32) {
    %c0_i32 = arith.constant 0 : i32
    %c0_i32_0 = arith.constant 0 : i32
    %c0_i32_1 = arith.constant 0 : i32
    return %arg0, %c0_i32, %c0_i32_0 : i32, i32, i32
  }
}

</mosaic_0001>

<llo_original>
// kernel: _gather_and_sim.1
$region0: #{_gather_and_sim.1}
  #allocation0 [shape = 'u32[]', space=smem, size = 0x4, offset = 0x4, fixed_abs, tag = 'smem constant byte address 0x4 - core index']
  #allocation1 [shape = 'u32[144,128]{1,0:T(1,128)}', space=vmem, size = 0x12000, scoped, tag = 'internal scratch']
  %s0 = inlined_call_operand.vmem [shape: f32[2,512,32], index: 0, kind: input, shape index: {}]
  %s1 = inlined_call_operand.vmem [shape: f32[2,256,32], index: 1, kind: input, shape index: {}]
  %s2 = inlined_call_operand.vmem [shape: f32[2,512,256], index: 2, kind: output, shape index: {}]
  %s3 = sld [smem:[#allocation0]]
  $region41: #{_gather_and_sim.1} parent=0
    _
  %s5 = ssub.s32 1, %s3
  %s6 = scalar_select 0, %s5, %s3
  loop: start=0, step=1, limit=4
  $region2: #{_gather_and_sim.1} parent=0 // loop_pre_header
    _
  $region3: #{_gather_and_sim.1} parent=0 // loop_header
    %s8 = sphi 0, %s12
    %p9 = scmp.ge.s32.totalorder %s8, 4
    %s18 = sphi 0, %s20
    %s21 = sphi 0, %s18
    %s22 = sphi 0, %s21
    %s38 = sphi 0, %s22
    %s44 = sphi 0, %s46
    %s47 = sphi 0, %s44
    %s48 = sphi 0, %s47
    %s64 = sphi 0, %s48
    %s70 = sphi 0, %s72
    %s73 = sphi 0, %s70
    %s74 = sphi 0, %s73
    %s90 = sphi 0, %s74
  $region4: #{_gather_and_sim.1} parent=0 // loop_header_branch
    %11 = sbr.rel (%p9) target = $region8
  $region5: #{_gather_and_sim.1} parent=0 // loop_body
    %s13 = ssub.s32 %s8, 1
    %s14 = ssub.s32 %s8, 2
    %s15 = sadd.s32 %s8, 1
    %s16 = ssub.s32 %s8, %s15
    %p17 = scmp.eq.s32.totalorder %s16, 0
    %s19 = sadd.s32 %s18, 1
    %s20 = scalar_select %p17, %s18, %s19
    %p23 = pneg %p17
    %p24 = scmp.eq.s32.totalorder %s8, 1
    %p25 = por %p23, %p24
    %p26 = scmp.ne.s32.totalorder %s18, %s21
    %p27 = scmp.eq.s32.totalorder %s8, 0
    %p28 = por %p26, %p27
    %p29 = scmp.ne.s32.totalorder %s18, %s21
    %p30 = scmp.eq.s32.totalorder %s13, 1
    %p31 = por %p29, %p30
    %p32 = scmp.ne.s32.totalorder %s21, %s22
    %p33 = scmp.eq.s32.totalorder %s13, 0
    %p34 = por %p32, %p33
    %p35 = scmp.ne.s32.totalorder %s21, %s22
    %p36 = scmp.eq.s32.totalorder %s14, 1
    %p37 = por %p35, %p36
    %p39 = scmp.ne.s32.totalorder %s22, %s38
    %p40 = scmp.eq.s32.totalorder %s14, 0
    %p41 = por %p39, %p40
    %s42 = ssub.s32 %s8, %s15
    %p43 = scmp.eq.s32.totalorder %s42, 0
    %s45 = sadd.s32 %s44, 1
    %s46 = scalar_select %p43, %s44, %s45
    %p49 = pneg %p43
    %p50 = scmp.eq.s32.totalorder %s8, 1
    %p51 = por %p49, %p50
    %p52 = scmp.ne.s32.totalorder %s44, %s47
    %p53 = scmp.eq.s32.totalorder %s8, 0
    %p54 = por %p52, %p53
    %p55 = scmp.ne.s32.totalorder %s44, %s47
    %p56 = scmp.eq.s32.totalorder %s13, 1
    %p57 = por %p55, %p56
    %p58 = scmp.ne.s32.totalorder %s47, %s48
    %p59 = scmp.eq.s32.totalorder %s13, 0
    %p60 = por %p58, %p59
    %p61 = scmp.ne.s32.totalorder %s47, %s48
    %p62 = scmp.eq.s32.totalorder %s14, 1
    %p63 = por %p61, %p62
    %p65 = scmp.ne.s32.totalorder %s48, %s64
    %p66 = scmp.eq.s32.totalorder %s14, 0
    %p67 = por %p65, %p66
    %s68 = ssub.s32 %s8, %s15
    %p69 = scmp.eq.s32.totalorder %s68, 0
    %s71 = sadd.s32 %s70, 1
    %s72 = scalar_select %p69, %s70, %s71
    %p75 = pneg %p69
    %p76 = scmp.eq.s32.totalorder %s8, 1
    %p77 = por %p75, %p76
    %p78 = scmp.ne.s32.totalorder %s70, %s73
    %p79 = scmp.eq.s32.totalorder %s8, 0
    %p80 = por %p78, %p79
    %p81 = scmp.ne.s32.totalorder %s70, %s73
    %p82 = scmp.eq.s32.totalorder %s13, 1
    %p83 = por %p81, %p82
    %p84 = scmp.ne.s32.totalorder %s73, %s74
    %p85 = scmp.eq.s32.totalorder %s13, 0
    %p86 = por %p84, %p85
    %p87 = scmp.ne.s32.totalorder %s73, %s74
    %p88 = scmp.eq.s32.totalorder %s14, 1
    %p89 = por %p87, %p88
    %p91 = scmp.ne.s32.totalorder %s74, %s90
    %p92 = scmp.eq.s32.totalorder %s14, 0
    %p93 = por %p91, %p92
    %p94 = scmp.le.s32.totalorder 1, %s8
    %p95 = scmp.lt.s32.totalorder %s8, 3
    %p96 = pnand %p94, %p95
    %p97 = pneg %p96
    // Predicated region
    $region9: #{_gather_and_sim.1} parent=5 // pred_check
      _
    $region10: #{_gather_and_sim.1} parent=5 // pred_check_branch
      %99 = sbr.rel (%p96) target = $region12
    $region11: #{_gather_and_sim.1} parent=5 // pred_region
      %s100 = ssub.s32 %s8, 1
    $region12: #{_gather_and_sim.1} parent=5 // pred_fallthru
      _
    %p101 = scmp.lt.s32.totalorder %s8, 2
    // Predicated region
    $region13: #{_gather_and_sim.1} parent=5 // pred_check
      %p102 = pneg %p101
    $region14: #{_gather_and_sim.1} parent=5 // pred_check_branch
      %104 = sbr.rel (%p102) target = $region16
    $region15: #{_gather_and_sim.1} parent=5 // pred_region
      // Predicated region
      $region17: #{_gather_and_sim.1} parent=15 // pred_check
        %p105 = pneg %p28
      $region18: #{_gather_and_sim.1} parent=15 // pred_check_branch
        %107 = sbr.rel (%p105) target = $region20
      $region19: #{_gather_and_sim.1} parent=15 // pred_region
        %p108 = scmp.lt.s32.totalorder %s8, 1
        %s109 = scalar_select %p108, %s8, 1
        %s110 = smul.addr %s109, 64
        %s111 = smul.addr %s110, 8
        %s112 = scalar_lea.vmem %s0, %s111
      $region20: #{_gather_and_sim.1} parent=15 // pred_fallthru
        _
      // Predicated region
      $region21: #{_gather_and_sim.1} parent=15 // pred_check
        %p113 = pneg %p54
      $region22: #{_gather_and_sim.1} parent=15 // pred_check_branch
        %115 = sbr.rel (%p113) target = $region24
      $region23: #{_gather_and_sim.1} parent=15 // pred_region
        %p116 = scmp.lt.s32.totalorder %s8, 1
        %s117 = scalar_select %p116, %s8, 1
        %s118 = smul.addr %s117, 32
        %s119 = smul.addr %s118, 8
        %s120 = scalar_lea.vmem %s1, %s119
      $region24: #{_gather_and_sim.1} parent=15 // pred_fallthru
        _
    $region16: #{_gather_and_sim.1} parent=5 // pred_fallthru
      _
    %p121 = scmp.le.s32.totalorder 1, %s8
    %p122 = scmp.lt.s32.totalorder %s8, 3
    %p123 = pnand %p121, %p122
    %p124 = pneg %p123
    // Predicated region
    $region25: #{_gather_and_sim.1} parent=5 // pred_check
      _
    $region26: #{_gather_and_sim.1} parent=5 // pred_check_branch
      %126 = sbr.rel (%p123) target = $region28
    $region27: #{_gather_and_sim.1} parent=5 // pred_region
      %s127 = ssub.s32 %s8, 1
      %p128 = scmp.lt.s32.totalorder %s13, 1
      %s129 = scalar_select %p128, %s13, 1
      %s130 = smul.addr %s129, 64
      %s131 = smul.addr %s130, 8
      %s132 = scalar_lea.vmem %s0, %s131
      %p133 = pneg %p34
      %p134 = pneg %p31
      %p135 = scmp.lt.s32.totalorder %s13, 1
      %s136 = scalar_select %p135, %s13, 1
      %s137 = smul.addr %s136, 32
      %s138 = smul.addr %s137, 8
      %s139 = scalar_lea.vmem %s1, %s138
      %p140 = pneg %p60
      %p141 = pneg %p57
      %p142 = pneg %p86
      %p143 = pneg %p83
      %p144 = scmp.lt.s32.totalorder %s13, 1
      %s145 = scalar_select %p144, %s13, 1
      %s146 = smul.addr %s145, 128
      %s147 = smul.addr %s146, 8
      %s148 = scalar_lea.vmem %s2, %s147
      %p149 = scmp.lt.s32.totalorder %s13, 1
      %s150 = scalar_select %p149, %s13, 1
      %s151 = smul.addr %s150, 64
      %s152 = smul.addr %s151, 8
      %s153 = scalar_lea.vmem %s0, %s152
      %p154 = scmp.lt.s32.totalorder %s13, 1
      %s155 = scalar_select %p154, %s13, 1
      %s156 = smul.addr %s155, 32
      %s157 = smul.addr %s156, 8
      %s158 = scalar_lea.vmem %s1, %s157
      %p159 = scmp.lt.s32.totalorder %s13, 1
      %s160 = scalar_select %p159, %s13, 1
      %s161 = smul.addr %s160, 128
      %s162 = smul.addr %s161, 8
      %s163 = scalar_lea.vmem %s2, %s162
      %v164 = vld [vmem:[%s153] sm:$0xff]
      %v165 = vld [vmem:[%s153 + $0x8] sm:$0xff]
      %v166 = vld [vmem:[%s153 + $0x10] sm:$0xff]
      %v167 = vld [vmem:[%s153 + $0x18] sm:$0xff]
      %v168 = vld [vmem:[%s153 + $0x20] sm:$0xff]
      %v169 = vld [vmem:[%s153 + $0x28] sm:$0xff]
      %v170 = vld [vmem:[%s153 + $0x30] sm:$0xff]
      %v171 = vld [vmem:[%s153 + $0x38] sm:$0xff]
      %v172 = vld [vmem:[%s153 + $0x40] sm:$0xff]
      %v173 = vld [vmem:[%s153 + $0x48] sm:$0xff]
      %v174 = vld [vmem:[%s153 + $0x50] sm:$0xff]
      %v175 = vld [vmem:[%s153 + $0x58] sm:$0xff]
      %v176 = vld [vmem:[%s153 + $0x60] sm:$0xff]
      %v177 = vld [vmem:[%s153 + $0x68] sm:$0xff]
      %v178 = vld [vmem:[%s153 + $0x70] sm:$0xff]
      %v179 = vld [vmem:[%s153 + $0x78] sm:$0xff]
      %v180 = vld [vmem:[%s153 + $0x80] sm:$0xff]
      %v181 = vld [vmem:[%s153 + $0x88] sm:$0xff]
      %v182 = vld [vmem:[%s153 + $0x90] sm:$0xff]
      %v183 = vld [vmem:[%s153 + $0x98] sm:$0xff]
      %v184 = vld [vmem:[%s153 + $0xa0] sm:$0xff]
      %v185 = vld [vmem:[%s153 + $0xa8] sm:$0xff]
      %v186 = vld [vmem:[%s153 + $0xb0] sm:$0xff]
      %v187 = vld [vmem:[%s153 + $0xb8] sm:$0xff]
      %v188 = vld [vmem:[%s153 + $0xc0] sm:$0xff]
      %v189 = vld [vmem:[%s153 + $0xc8] sm:$0xff]
      %v190 = vld [vmem:[%s153 + $0xd0] sm:$0xff]
      %v191 = vld [vmem:[%s153 + $0xd8] sm:$0xff]
      %v192 = vld [vmem:[%s153 + $0xe0] sm:$0xff]
      %v193 = vld [vmem:[%s153 + $0xe8] sm:$0xff]
      %v194 = vld [vmem:[%s153 + $0xf0] sm:$0xff]
      %v195 = vld [vmem:[%s153 + $0xf8] sm:$0xff]
      %v196 = vld [vmem:[%s153 + $0x100] sm:$0xff]
      %v197 = vld [vmem:[%s153 + $0x108] sm:$0xff]
      %v198 = vld [vmem:[%s153 + $0x110] sm:$0xff]
      %v199 = vld [vmem:[%s153 + $0x118] sm:$0xff]
      %v200 = vld [vmem:[%s153 + $0x120] sm:$0xff]
      %v201 = vld [vmem:[%s153 + $0x128] sm:$0xff]
      %v202 = vld [vmem:[%s153 + $0x130] sm:$0xff]
      %v203 = vld [vmem:[%s153 + $0x138] sm:$0xff]
      %v204 = vld [vmem:[%s153 + $0x140] sm:$0xff]
      %v205 = vld [vmem:[%s153 + $0x148] sm:$0xff]
      %v206 = vld [vmem:[%s153 + $0x150] sm:$0xff]
      %v207 = vld [vmem:[%s153 + $0x158] sm:$0xff]
      %v208 = vld [vmem:[%s153 + $0x160] sm:$0xff]
      %v209 = vld [vmem:[%s153 + $0x168] sm:$0xff]
      %v210 = vld [vmem:[%s153 + $0x170] sm:$0xff]
      %v211 = vld [vmem:[%s153 + $0x178] sm:$0xff]
      %v212 = vld [vmem:[%s153 + $0x180] sm:$0xff]
      %v213 = vld [vmem:[%s153 + $0x188] sm:$0xff]
      %v214 = vld [vmem:[%s153 + $0x190] sm:$0xff]
      %v215 = vld [vmem:[%s153 + $0x198] sm:$0xff]
      %v216 = vld [vmem:[%s153 + $0x1a0] sm:$0xff]
      %v217 = vld [vmem:[%s153 + $0x1a8] sm:$0xff]
      %v218 = vld [vmem:[%s153 + $0x1b0] sm:$0xff]
      %v219 = vld [vmem:[%s153 + $0x1b8] sm:$0xff]
      %v220 = vld [vmem:[%s153 + $0x1c0] sm:$0xff]
      %v221 = vld [vmem:[%s153 + $0x1c8] sm:$0xff]
      %v222 = vld [vmem:[%s153 + $0x1d0] sm:$0xff]
      %v223 = vld [vmem:[%s153 + $0x1d8] sm:$0xff]
      %v224 = vld [vmem:[%s153 + $0x1e0] sm:$0xff]
      %v225 = vld [vmem:[%s153 + $0x1e8] sm:$0xff]
      %v226 = vld [vmem:[%s153 + $0x1f0] sm:$0xff]
      %v227 = vld [vmem:[%s153 + $0x1f8] sm:$0xff]
      %v228 = vld [vmem:[%s158] sm:$0xff]
      %v229 = vld [vmem:[%s158 + $0x8] sm:$0xff]
      %v230 = vld [vmem:[%s158 + $0x10] sm:$0xff]
      %v231 = vld [vmem:[%s158 + $0x18] sm:$0xff]
      %v232 = vld [vmem:[%s158 + $0x20] sm:$0xff]
      %v233 = vld [vmem:[%s158 + $0x28] sm:$0xff]
      %v234 = vld [vmem:[%s158 + $0x30] sm:$0xff]
      %v235 = vld [vmem:[%s158 + $0x38] sm:$0xff]
      %v236 = vld [vmem:[%s158 + $0x40] sm:$0xff]
      %v237 = vld [vmem:[%s158 + $0x48] sm:$0xff]
      %v238 = vld [vmem:[%s158 + $0x50] sm:$0xff]
      %v239 = vld [vmem:[%s158 + $0x58] sm:$0xff]
      %v240 = vld [vmem:[%s158 + $0x60] sm:$0xff]
      %v241 = vld [vmem:[%s158 + $0x68] sm:$0xff]
      %v242 = vld [vmem:[%s158 + $0x70] sm:$0xff]
      %v243 = vld [vmem:[%s158 + $0x78] sm:$0xff]
      %v244 = vld [vmem:[%s158 + $0x80] sm:$0xff]
      %v245 = vld [vmem:[%s158 + $0x88] sm:$0xff]
      %v246 = vld [vmem:[%s158 + $0x90] sm:$0xff]
      %v247 = vld [vmem:[%s158 + $0x98] sm:$0xff]
      %v248 = vld [vmem:[%s158 + $0xa0] sm:$0xff]
      %v249 = vld [vmem:[%s158 + $0xa8] sm:$0xff]
      %v250 = vld [vmem:[%s158 + $0xb0] sm:$0xff]
      %v251 = vld [vmem:[%s158 + $0xb8] sm:$0xff]
      %v252 = vld [vmem:[%s158 + $0xc0] sm:$0xff]
      %v253 = vld [vmem:[%s158 + $0xc8] sm:$0xff]
      %v254 = vld [vmem:[%s158 + $0xd0] sm:$0xff]
      %v255 = vld [vmem:[%s158 + $0xd8] sm:$0xff]
      %v256 = vld [vmem:[%s158 + $0xe0] sm:$0xff]
      %v257 = vld [vmem:[%s158 + $0xe8] sm:$0xff]
      %v258 = vld [vmem:[%s158 + $0xf0] sm:$0xff]
      %v259 = vld [vmem:[%s158 + $0xf8] sm:$0xff]
      %vm260 = vcmask 261120
      %v262 = vsel %vm260, %v164, 0
      %v265 = vsel %vm260, %v165, 0
      %v268 = vsel %vm260, %v166, 0
      %v271 = vsel %vm260, %v167, 0
      %v274 = vsel %vm260, %v168, 0
      %v277 = vsel %vm260, %v169, 0
      %v280 = vsel %vm260, %v170, 0
      %v283 = vsel %vm260, %v171, 0
      %v286 = vsel %vm260, %v172, 0
      %v289 = vsel %vm260, %v173, 0
      %v292 = vsel %vm260, %v174, 0
      %v295 = vsel %vm260, %v175, 0
      %v298 = vsel %vm260, %v176, 0
      %v301 = vsel %vm260, %v177, 0
      %v304 = vsel %vm260, %v178, 0
      %v307 = vsel %vm260, %v179, 0
      %v310 = vsel %vm260, %v180, 0
      %v313 = vsel %vm260, %v181, 0
      %v316 = vsel %vm260, %v182, 0
      %v319 = vsel %vm260, %v183, 0
      %v322 = vsel %vm260, %v184, 0
      %v325 = vsel %vm260, %v185, 0
      %v328 = vsel %vm260, %v186, 0
      %v331 = vsel %vm260, %v187, 0
      %v334 = vsel %vm260, %v188, 0
      %v337 = vsel %vm260, %v189, 0
      %v340 = vsel %vm260, %v190, 0
      %v343 = vsel %vm260, %v191, 0
      %v346 = vsel %vm260, %v192, 0
      %v349 = vsel %vm260, %v193, 0
      %v352 = vsel %vm260, %v194, 0
      %v355 = vsel %vm260, %v195, 0
      %v358 = vsel %vm260, %v196, 0
      %v361 = vsel %vm260, %v197, 0
      %v364 = vsel %vm260, %v198, 0
      %v367 = vsel %vm260, %v199, 0
      %v370 = vsel %vm260, %v200, 0
      %v373 = vsel %vm260, %v201, 0
      %v376 = vsel %vm260, %v202, 0
      %v379 = vsel %vm260, %v203, 0
      %v382 = vsel %vm260, %v204, 0
      %v385 = vsel %vm260, %v205, 0
      %v388 = vsel %vm260, %v206, 0
      %v391 = vsel %vm260, %v207, 0
      %v394 = vsel %vm260, %v208, 0
      %v397 = vsel %vm260, %v209, 0
      %v400 = vsel %vm260, %v210, 0
      %v403 = vsel %vm260, %v211, 0
      %v406 = vsel %vm260, %v212, 0
      %v409 = vsel %vm260, %v213, 0
      %v412 = vsel %vm260, %v214, 0
      %v415 = vsel %vm260, %v215, 0
      %v418 = vsel %vm260, %v216, 0
      %v421 = vsel %vm260, %v217, 0
      %v424 = vsel %vm260, %v218, 0
      %v427 = vsel %vm260, %v219, 0
      %v430 = vsel %vm260, %v220, 0
      %v433 = vsel %vm260, %v221, 0
      %v436 = vsel %vm260, %v222, 0
      %v439 = vsel %vm260, %v223, 0
      %v442 = vsel %vm260, %v224, 0
      %v445 = vsel %vm260, %v225, 0
      %v448 = vsel %vm260, %v226, 0
      %v451 = vsel %vm260, %v227, 0
      %v454 = vsel %vm260, %v228, 0
      %v457 = vsel %vm260, %v229, 0
      %v460 = vsel %vm260, %v230, 0
      %v463 = vsel %vm260, %v231, 0
      %v466 = vsel %vm260, %v232, 0
      %v469 = vsel %vm260, %v233, 0
      %v472 = vsel %vm260, %v234, 0
      %v475 = vsel %vm260, %v235, 0
      %v478 = vsel %vm260, %v236, 0
      %v481 = vsel %vm260, %v237, 0
      %v484 = vsel %vm260, %v238, 0
      %v487 = vsel %vm260, %v239, 0
      %v490 = vsel %vm260, %v240, 0
      %v493 = vsel %vm260, %v241, 0
      %v496 = vsel %vm260, %v242, 0
      %v499 = vsel %vm260, %v243, 0
      %v502 = vsel %vm260, %v244, 0
      %v505 = vsel %vm260, %v245, 0
      %v508 = vsel %vm260, %v246, 0
      %v511 = vsel %vm260, %v247, 0
      %v514 = vsel %vm260, %v248, 0
      %v517 = vsel %vm260, %v249, 0
      %v520 = vsel %vm260, %v250, 0
      %v523 = vsel %vm260, %v251, 0
      %v526 = vsel %vm260, %v252, 0
      %v529 = vsel %vm260, %v253, 0
      %v532 = vsel %vm260, %v254, 0
      %v535 = vsel %vm260, %v255, 0
      %v538 = vsel %vm260, %v256, 0
      %v541 = vsel %vm260, %v257, 0
      %v544 = vsel %vm260, %v258, 0
      %v547 = vsel %vm260, %v259, 0
      %549 = vmatprep.subr.mxu0 0.0
      %550 = vmatpush1.xpose.msra.mxu0 %v454
      %551 = vmatprep.subr.mxu0 0.0
      %552 = vmatpush1.xpose.msra.mxu0 %v457
      %553 = vmatprep.subr.mxu0 0.0
      %554 = vmatpush1.xpose.msra.mxu0 %v460
      %555 = vmatprep.subr.mxu0 0.0
      %556 = vmatpush1.xpose.msra.mxu0 %v463
      %557 = vmatprep.subr.mxu0 0.0
      %558 = vmatpush1.xpose.msra.mxu0 %v466
      %559 = vmatprep.subr.mxu0 0.0
      %560 = vmatpush1.xpose.msra.mxu0 %v469
      %561 = vmatprep.subr.mxu0 0.0
      %562 = vmatpush1.xpose.msra.mxu0 %v472
      %563 = vmatprep.subr.mxu0 0.0
      %564 = vmatpush1.xpose.msra.mxu0 %v475
      %565 = vmatprep.subr.mxu0 0.0
      %566 = vmatpush1.xpose.msra.mxu0 %v478
      %567 = vmatprep.subr.mxu0 0.0
      %568 = vmatpush1.xpose.msra.mxu0 %v481
      %569 = vmatprep.subr.mxu0 0.0
      %570 = vmatpush1.xpose.msra.mxu0 %v484
      %571 = vmatprep.subr.mxu0 0.0
      %572 = vmatpush1.xpose.msra.mxu0 %v487
      %573 = vmatprep.subr.mxu0 0.0
      %574 = vmatpush1.xpose.msra.mxu0 %v490
      %575 = vmatprep.subr.mxu0 0.0
      %576 = vmatpush1.xpose.msra.mxu0 %v493
      %577 = vmatprep.subr.mxu0 0.0
      %578 = vmatpush1.xpose.msra.mxu0 %v496
      %579 = vmatprep.subr.mxu0 0.0
      %580 = vmatpush1.xpose.msra.mxu0 %v499
      %581 = vmatprep.subr.mxu0 0.0
      %582 = vmatpush1.xpose.msra.mxu0 %v502
      %583 = vmatprep.subr.mxu0 0.0
      %584 = vmatpush1.xpose.msra.mxu0 %v505
      %585 = vmatprep.subr.mxu0 0.0
      %586 = vmatpush1.xpose.msra.mxu0 %v508
      %587 = vmatprep.subr.mxu0 0.0
      %588 = vmatpush1.xpose.msra.mxu0 %v511
      %589 = vmatprep.subr.mxu0 0.0
      %590 = vmatpush1.xpose.msra.mxu0 %v514
      %591 = vmatprep.subr.mxu0 0.0
      %592 = vmatpush1.xpose.msra.mxu0 %v517
      %593 = vmatprep.subr.mxu0 0.0
      %594 = vmatpush1.xpose.msra.mxu0 %v520
      %595 = vmatprep.subr.mxu0 0.0
      %596 = vmatpush1.xpose.msra.mxu0 %v523
      %597 = vmatprep.subr.mxu0 0.0
      %598 = vmatpush1.xpose.msra.mxu0 %v526
      %599 = vmatprep.subr.mxu0 0.0
      %600 = vmatpush1.xpose.msra.mxu0 %v529
      %601 = vmatprep.subr.mxu0 0.0
      %602 = vmatpush1.xpose.msra.mxu0 %v532
      %603 = vmatprep.subr.mxu0 0.0
      %604 = vmatpush1.xpose.msra.mxu0 %v535
      %605 = vmatprep.subr.mxu0 0.0
      %606 = vmatpush1.xpose.msra.mxu0 %v538
      %607 = vmatprep.subr.mxu0 0.0
      %608 = vmatpush1.xpose.msra.mxu0 %v541
      %609 = vmatprep.subr.mxu0 0.0
      %610 = vmatpush1.xpose.msra.mxu0 %v544
      %611 = vmatprep.subr.mxu0 0.0
      %612 = vmatpush1.xpose.msra.mxu0 %v547
      %613 = vmatprep.mubr.f32.mxu0 0.0
      %614 = vmatmul.mubr.f32.gmra.mrb[0].mxu0 %v262
      %v615 = vpop.f32.mrb[0].mxu0
      %v616 = vadd.f32 0.0, %v615
      %v617 = vpop.f32.mrb[0].mxu0
      %v618 = vadd.f32 0.0, %v617
      %619 = vmatprep.mubr.f32.mxu0 0.0
      %620 = vmatmul.mubr.f32.gmra.mrb[0].mxu0 %v265
      %v621 = vpop.f32.mrb[0].mxu0
      %v622 = vadd.f32 0.0, %v621
      %v623 = vpop.f32.mrb[0].mxu0
      %v624 = vadd.f32 0.0, %v623
      %625 = vmatprep.mubr.f32.mxu0 0.0
      %626 = vmatmul.mubr.f32.gmra.mrb[0].mxu0 %v268
      %v627 = vpop.f32.mrb[0].mxu0
      %v628 = vadd.f32 0.0, %v627
      %v629 = vpop.f32.mrb[0].mxu0
      %v630 = vadd.f32 0.0, %v629
      %631 = vmatprep.mubr.f32.mxu0 0.0
      %632 = vmatmul.mubr.f32.gmra.mrb[0].mxu0 %v271
      %v633 = vpop.f32.mrb[0].mxu0
      %v634 = vadd.f32 0.0, %v633
      %v635 = vpop.f32.mrb[0].mxu0
      %v636 = vadd.f32 0.0, %v635
      %637 = vmatprep.mubr.f32.mxu0 0.0
      %638 = vmatmul.mubr.f32.gmra.mrb[0].mxu0 %v274
      %v639 = vpop.f32.mrb[0].mxu0
      %v640 = vadd.f32 0.0, %v639
      %v641 = vpop.f32.mrb[0].mxu0
      %v642 = vadd.f32 0.0, %v641
      %643 = vmatprep.mubr.f32.mxu0 0.0
      %644 = vmatmul.mubr.f32.gmra.mrb[0].mxu0 %v277
      %v645 = vpop.f32.mrb[0].mxu0
      %v646 = vadd.f32 0.0, %v645
      %v647 = vpop.f32.mrb[0].mxu0
      %v648 = vadd.f32 0.0, %v647
      %649 = vmatprep.mubr.f32.mxu0 0.0
      %650 = vmatmul.mubr.f32.gmra.mrb[0].mxu0 %v280
      %v651 = vpop.f32.mrb[0].mxu0
      %v652 = vadd.f32 0.0, %v651
      %v653 = vpop.f32.mrb[0].mxu0
      %v654 = vadd.f32 0.0, %v653
      %655 = vmatprep.mubr.f32.mxu0 0.0
      %656 = vmatmul.mubr.f32.gmra.mrb[0].mxu0 %v283
      %v657 = vpop.f32.mrb[0].mxu0
      %v658 = vadd.f32 0.0, %v657
      %v659 = vpop.f32.mrb[0].mxu0
      %v660 = vadd.f32 0.0, %v659
      %661 = vmatprep.mubr.f32.mxu0 0.0
      %662 = vmatmul.mubr.f32.gmra.mrb[0].mxu0 %v286
      %v663 = vpop.f32.mrb[0].mxu0
      %v664 = vadd.f32 0.0, %v663
      %v665 = vpop.f32.mrb[0].mxu0
      %v666 = vadd.f32 0.0, %v665
      %667 = vmatprep.mubr.f32.mxu0 0.0
      %668 = vmatmul.mubr.f32.gmra.mrb[0].mxu0 %v289
      %v669 = vpop.f32.mrb[0].mxu0
      %v670 = vadd.f32 0.0, %v669
      %v671 = vpop.f32.mrb[0].mxu0
      %v672 = vadd.f32 0.0, %v671
      %673 = vmatprep.mubr.f32.mxu0 0.0
      %674 = vmatmul.mubr.f32.gmra.mrb[0].mxu0 %v292
      %v675 = vpop.f32.mrb[0].mxu0
      %v676 = vadd.f32 0.0, %v675
      %v677 = vpop.f32.mrb[0].mxu0
      %v678 = vadd.f32 0.0, %v677
      %679 = vmatprep.mubr.f32.mxu0 0.0
      %680 = vmatmul.mubr.f32.gmra.mrb[0].mxu0 %v295
      %v681 = vpop.f32.mrb[0].mxu0
      %v682 = vadd.f32 0.0, %v681
      %v683 = vpop.f32.mrb[0].mxu0
      %v684 = vadd.f32 0.0, %v683
      %685 = vmatprep.mubr.f32.mxu0 0.0
      %686 = vmatmul.mubr.f32.gmra.mrb[0].mxu0 %v298
      %v687 = vpop.f32.mrb[0].mxu0
      %v688 = vadd.f32 0.0, %v687
      %v689 = vpop.f32.mrb[0].mxu0
      %v690 = vadd.f32 0.0, %v689
      %691 = vmatprep.mubr.f32.mxu0 0.0
      %692 = vmatmul.mubr.f32.gmra.mrb[0].mxu0 %v301
      %v693 = vpop.f32.mrb[0].mxu0
      %v694 = vadd.f32 0.0, %v693
      %v695 = vpop.f32.mrb[0].mxu0
      %v696 = vadd.f32 0.0, %v695
      %697 = vmatprep.mubr.f32.mxu0 0.0
      %698 = vmatmul.mubr.f32.gmra.mrb[0].mxu0 %v304
      %v699 = vpop.f32.mrb[0].mxu0
      %v700 = vadd.f32 0.0, %v699
      %v701 = vpop.f32.mrb[0].mxu0
      %v702 = vadd.f32 0.0, %v701
      %703 = vmatprep.mubr.f32.mxu0 0.0
      %704 = vmatmul.mubr.f32.gmra.mrb[0].mxu0 %v307
      %v705 = vpop.f32.mrb[0].mxu0
      %v706 = vadd.f32 0.0, %v705
      %v707 = vpop.f32.mrb[0].mxu0
      %v708 = vadd.f32 0.0, %v707
      %709 = vmatprep.mubr.f32.mxu0 0.0
      %710 = vmatmul.mubr.f32.gmra.mrb[0].mxu0 %v310
      %v711 = vpop.f32.mrb[0].mxu0
      %v712 = vadd.f32 0.0, %v711
      %v713 = vpop.f32.mrb[0].mxu0
      %v714 = vadd.f32 0.0, %v713
      %715 = vmatprep.mubr.f32.mxu0 0.0
      %716 = vmatmul.mubr.f32.gmra.mrb[0].mxu0 %v313
      %v717 = vpop.f32.mrb[0].mxu0
      %v718 = vadd.f32 0.0, %v717
      %v719 = vpop.f32.mrb[0].mxu0
      %v720 = vadd.f32 0.0, %v719
      %721 = vmatprep.mubr.f32.mxu0 0.0
      %722 = vmatmul.mubr.f32.gmra.mrb[0].mxu0 %v316
      %v723 = vpop.f32.mrb[0].mxu0
      %v724 = vadd.f32 0.0, %v723
      %v725 = vpop.f32.mrb[0].mxu0
      %v726 = vadd.f32 0.0, %v725
      %727 = vmatprep.mubr.f32.mxu0 0.0
      %728 = vmatmul.mubr.f32.gmra.mrb[0].mxu0 %v319
      %v729 = vpop.f32.mrb[0].mxu0
      %v730 = vadd.f32 0.0, %v729
      %v731 = vpop.f32.mrb[0].mxu0
      %v732 = vadd.f32 0.0, %v731
      %733 = vmatprep.mubr.f32.mxu0 0.0
      %734 = vmatmul.mubr.f32.gmra.mrb[0].mxu0 %v322
      %v735 = vpop.f32.mrb[0].mxu0
      %v736 = vadd.f32 0.0, %v735
      %v737 = vpop.f32.mrb[0].mxu0
      %v738 = vadd.f32 0.0, %v737
      %739 = vmatprep.mubr.f32.mxu0 0.0
      %740 = vmatmul.mubr.f32.gmra.mrb[0].mxu0 %v325
      %v741 = vpop.f32.mrb[0].mxu0
      %v742 = vadd.f32 0.0, %v741
      %v743 = vpop.f32.mrb[0].mxu0
      %v744 = vadd.f32 0.0, %v743
      %745 = vmatprep.mubr.f32.mxu0 0.0
      %746 = vmatmul.mubr.f32.gmra.mrb[0].mxu0 %v328
      %v747 = vpop.f32.mrb[0].mxu0
      %v748 = vadd.f32 0.0, %v747
      %v749 = vpop.f32.mrb[0].mxu0
      %v750 = vadd.f32 0.0, %v749
      %751 = vmatprep.mubr.f32.mxu0 0.0
      %752 = vmatmul.mubr.f32.gmra.mrb[0].mxu0 %v331
      %v753 = vpop.f32.mrb[0].mxu0
      %v754 = vadd.f32 0.0, %v753
      %v755 = vpop.f32.mrb[0].mxu0
      %v756 = vadd.f32 0.0, %v755
      %757 = vmatprep.mubr.f32.mxu0 0.0
      %758 = vmatmul.mubr.f32.gmra.mrb[0].mxu0 %v334
      %v759 = vpop.f32.mrb[0].mxu0
      %v760 = vadd.f32 0.0, %v759
      %v761 = vpop.f32.mrb[0].mxu0
      %v762 = vadd.f32 0.0, %v761
      %763 = vmatprep.mubr.f32.mxu0 0.0
      %764 = vmatmul.mubr.f32.gmra.mrb[0].mxu0 %v337
      %v765 = vpop.f32.mrb[0].mxu0
      %v766 = vadd.f32 0.0, %v765
      %v767 = vpop.f32.mrb[0].mxu0
      %v768 = vadd.f32 0.0, %v767
      %769 = vmatprep.mubr.f32.mxu0 0.0
      %770 = vmatmul.mubr.f32.gmra.mrb[0].mxu0 %v340
      %v771 = vpop.f32.mrb[0].mxu0
      %v772 = vadd.f32 0.0, %v771
      %v773 = vpop.f32.mrb[0].mxu0
      %v774 = vadd.f32 0.0, %v773
      %775 = vmatprep.mubr.f32.mxu0 0.0
      %776 = vmatmul.mubr.f32.gmra.mrb[0].mxu0 %v343
      %v777 = vpop.f32.mrb[0].mxu0
      %v778 = vadd.f32 0.0, %v777
      %v779 = vpop.f32.mrb[0].mxu0
      %v780 = vadd.f32 0.0, %v779
      %781 = vmatprep.mubr.f32.mxu0 0.0
      %782 = vmatmul.mubr.f32.gmra.mrb[0].mxu0 %v346
      %v783 = vpop.f32.mrb[0].mxu0
      %v784 = vadd.f32 0.0, %v783
      %v785 = vpop.f32.mrb[0].mxu0
      %v786 = vadd.f32 0.0, %v785
      %787 = vmatprep.mubr.f32.mxu0 0.0
      %788 = vmatmul.mubr.f32.gmra.mrb[0].mxu0 %v349
      %v789 = vpop.f32.mrb[0].mxu0
      %v790 = vadd.f32 0.0, %v789
      %v791 = vpop.f32.mrb[0].mxu0
      %v792 = vadd.f32 0.0, %v791
      %793 = vmatprep.mubr.f32.mxu0 0.0
      %794 = vmatmul.mubr.f32.gmra.mrb[0].mxu0 %v352
      %v795 = vpop.f32.mrb[0].mxu0
      %v796 = vadd.f32 0.0, %v795
      %v797 = vpop.f32.mrb[0].mxu0
      %v798 = vadd.f32 0.0, %v797
      %799 = vmatprep.mubr.f32.mxu0 0.0
      %800 = vmatmul.mubr.f32.gmra.mrb[0].mxu0 %v355
      %v801 = vpop.f32.mrb[0].mxu0
      %v802 = vadd.f32 0.0, %v801
      %v803 = vpop.f32.mrb[0].mxu0
      %v804 = vadd.f32 0.0, %v803
      %805 = vmatprep.mubr.f32.mxu0 0.0
      %806 = vmatmul.mubr.f32.gmra.mrb[0].mxu0 %v358
      %v807 = vpop.f32.mrb[0].mxu0
      %v808 = vadd.f32 0.0, %v807
      %v809 = vpop.f32.mrb[0].mxu0
      %v810 = vadd.f32 0.0, %v809
      %811 = vmatprep.mubr.f32.mxu0 0.0
      %812 = vmatmul.mubr.f32.gmra.mrb[0].mxu0 %v361
      %v813 = vpop.f32.mrb[0].mxu0
      %v814 = vadd.f32 0.0, %v813
      %v815 = vpop.f32.mrb[0].mxu0
      %v816 = vadd.f32 0.0, %v815
      %817 = vmatprep.mubr.f32.mxu0 0.0
      %818 = vmatmul.mubr.f32.gmra.mrb[0].mxu0 %v364
      %v819 = vpop.f32.mrb[0].mxu0
      %v820 = vadd.f32 0.0, %v819
      %v821 = vpop.f32.mrb[0].mxu0
      %v822 = vadd.f32 0.0, %v821
      %823 = vmatprep.mubr.f32.mxu0 0.0
      %824 = vmatmul.mubr.f32.gmra.mrb[0].mxu0 %v367
      %v825 = vpop.f32.mrb[0].mxu0
      %v826 = vadd.f32 0.0, %v825
      %v827 = vpop.f32.mrb[0].mxu0
      %v828 = vadd.f32 0.0, %v827
      %829 = vmatprep.mubr.f32.mxu0 0.0
      %830 = vmatmul.mubr.f32.gmra.mrb[0].mxu0 %v370
      %v831 = vpop.f32.mrb[0].mxu0
      %v832 = vadd.f32 0.0, %v831
      %v833 = vpop.f32.mrb[0].mxu0
      %v834 = vadd.f32 0.0, %v833
      %835 = vmatprep.mubr.f32.mxu0 0.0
      %836 = vmatmul.mubr.f32.gmra.mrb[0].mxu0 %v373
      %v837 = vpop.f32.mrb[0].mxu0
      %v838 = vadd.f32 0.0, %v837
      %v839 = vpop.f32.mrb[0].mxu0
      %v840 = vadd.f32 0.0, %v839
      %841 = vmatprep.mubr.f32.mxu0 0.0
      %842 = vmatmul.mubr.f32.gmra.mrb[0].mxu0 %v376
      %v843 = vpop.f32.mrb[0].mxu0
      %v844 = vadd.f32 0.0, %v843
      %v845 = vpop.f32.mrb[0].mxu0
      %v846 = vadd.f32 0.0, %v845
      %847 = vmatprep.mubr.f32.mxu0 0.0
      %848 = vmatmul.mubr.f32.gmra.mrb[0].mxu0 %v379
      %v849 = vpop.f32.mrb[0].mxu0
      %v850 = vadd.f32 0.0, %v849
      %v851 = vpop.f32.mrb[0].mxu0
      %v852 = vadd.f32 0.0, %v851
      %853 = vmatprep.mubr.f32.mxu0 0.0
      %854 = vmatmul.mubr.f32.gmra.mrb[0].mxu0 %v382
      %v855 = vpop.f32.mrb[0].mxu0
      %v856 = vadd.f32 0.0, %v855
      %v857 = vpop.f32.mrb[0].mxu0
      %v858 = vadd.f32 0.0, %v857
      %859 = vmatprep.mubr.f32.mxu0 0.0
      %860 = vmatmul.mubr.f32.gmra.mrb[0].mxu0 %v385
      %v861 = vpop.f32.mrb[0].mxu0
      %v862 = vadd.f32 0.0, %v861
      %v863 = vpop.f32.mrb[0].mxu0
      %v864 = vadd.f32 0.0, %v863
      %865 = vmatprep.mubr.f32.mxu0 0.0
      %866 = vmatmul.mubr.f32.gmra.mrb[0].mxu0 %v388
      %v867 = vpop.f32.mrb[0].mxu0
      %v868 = vadd.f32 0.0, %v867
      %v869 = vpop.f32.mrb[0].mxu0
      %v870 = vadd.f32 0.0, %v869
      %871 = vmatprep.mubr.f32.mxu0 0.0
      %872 = vmatmul.mubr.f32.gmra.mrb[0].mxu0 %v391
      %v873 = vpop.f32.mrb[0].mxu0
      %v874 = vadd.f32 0.0, %v873
      %v875 = vpop.f32.mrb[0].mxu0
      %v876 = vadd.f32 0.0, %v875
      %877 = vmatprep.mubr.f32.mxu0 0.0
      %878 = vmatmul.mubr.f32.gmra.mrb[0].mxu0 %v394
      %v879 = vpop.f32.mrb[0].mxu0
      %v880 = vadd.f32 0.0, %v879
      %v881 = vpop.f32.mrb[0].mxu0
      %v882 = vadd.f32 0.0, %v881
      %883 = vmatprep.mubr.f32.mxu0 0.0
      %884 = vmatmul.mubr.f32.gmra.mrb[0].mxu0 %v397
      %v885 = vpop.f32.mrb[0].mxu0
      %v886 = vadd.f32 0.0, %v885
      %v887 = vpop.f32.mrb[0].mxu0
      %v888 = vadd.f32 0.0, %v887
      %889 = vmatprep.mubr.f32.mxu0 0.0
      %890 = vmatmul.mubr.f32.gmra.mrb[0].mxu0 %v400
      %v891 = vpop.f32.mrb[0].mxu0
      %v892 = vadd.f32 0.0, %v891
      %v893 = vpop.f32.mrb[0].mxu0
      %v894 = vadd.f32 0.0, %v893
      %895 = vmatprep.mubr.f32.mxu0 0.0
      %896 = vmatmul.mubr.f32.gmra.mrb[0].mxu0 %v403
      %v897 = vpop.f32.mrb[0].mxu0
      %v898 = vadd.f32 0.0, %v897
      %v899 = vpop.f32.mrb[0].mxu0
      %v900 = vadd.f32 0.0, %v899
      %901 = vmatprep.mubr.f32.mxu0 0.0
      %902 = vmatmul.mubr.f32.gmra.mrb[0].mxu0 %v406
      %v903 = vpop.f32.mrb[0].mxu0
      %v904 = vadd.f32 0.0, %v903
      %v905 = vpop.f32.mrb[0].mxu0
      %v906 = vadd.f32 0.0, %v905
      %907 = vmatprep.mubr.f32.mxu0 0.0
      %908 = vmatmul.mubr.f32.gmra.mrb[0].mxu0 %v409
      %v909 = vpop.f32.mrb[0].mxu0
      %v910 = vadd.f32 0.0, %v909
      %v911 = vpop.f32.mrb[0].mxu0
      %v912 = vadd.f32 0.0, %v911
      %913 = vmatprep.mubr.f32.mxu0 0.0
      %914 = vmatmul.mubr.f32.gmra.mrb[0].mxu0 %v412
      %v915 = vpop.f32.mrb[0].mxu0
      %v916 = vadd.f32 0.0, %v915
      %v917 = vpop.f32.mrb[0].mxu0
      %v918 = vadd.f32 0.0, %v917
      %919 = vmatprep.mubr.f32.mxu0 0.0
      %920 = vmatmul.mubr.f32.gmra.mrb[0].mxu0 %v415
      %v921 = vpop.f32.mrb[0].mxu0
      %v922 = vadd.f32 0.0, %v921
      %v923 = vpop.f32.mrb[0].mxu0
      %v924 = vadd.f32 0.0, %v923
      %925 = vmatprep.mubr.f32.mxu0 0.0
      %926 = vmatmul.mubr.f32.gmra.mrb[0].mxu0 %v418
      %v927 = vpop.f32.mrb[0].mxu0
      %v928 = vadd.f32 0.0, %v927
      %v929 = vpop.f32.mrb[0].mxu0
      %v930 = vadd.f32 0.0, %v929
      %931 = vmatprep.mubr.f32.mxu0 0.0
      %932 = vmatmul.mubr.f32.gmra.mrb[0].mxu0 %v421
      %v933 = vpop.f32.mrb[0].mxu0
      %v934 = vadd.f32 0.0, %v933
      %v935 = vpop.f32.mrb[0].mxu0
      %v936 = vadd.f32 0.0, %v935
      %937 = vmatprep.mubr.f32.mxu0 0.0
      %938 = vmatmul.mubr.f32.gmra.mrb[0].mxu0 %v424
      %v939 = vpop.f32.mrb[0].mxu0
      %v940 = vadd.f32 0.0, %v939
      %v941 = vpop.f32.mrb[0].mxu0
      %v942 = vadd.f32 0.0, %v941
      %943 = vmatprep.mubr.f32.mxu0 0.0
      %944 = vmatmul.mubr.f32.gmra.mrb[0].mxu0 %v427
      %v945 = vpop.f32.mrb[0].mxu0
      %v946 = vadd.f32 0.0, %v945
      %v947 = vpop.f32.mrb[0].mxu0
      %v948 = vadd.f32 0.0, %v947
      %949 = vmatprep.mubr.f32.mxu0 0.0
      %950 = vmatmul.mubr.f32.gmra.mrb[0].mxu0 %v430
      %v951 = vpop.f32.mrb[0].mxu0
      %v952 = vadd.f32 0.0, %v951
      %v953 = vpop.f32.mrb[0].mxu0
      %v954 = vadd.f32 0.0, %v953
      %955 = vmatprep.mubr.f32.mxu0 0.0
      %956 = vmatmul.mubr.f32.gmra.mrb[0].mxu0 %v433
      %v957 = vpop.f32.mrb[0].mxu0
      %v958 = vadd.f32 0.0, %v957
      %v959 = vpop.f32.mrb[0].mxu0
      %v960 = vadd.f32 0.0, %v959
      %961 = vmatprep.mubr.f32.mxu0 0.0
      %962 = vmatmul.mubr.f32.gmra.mrb[0].mxu0 %v436
      %v963 = vpop.f32.mrb[0].mxu0
      %v964 = vadd.f32 0.0, %v963
      %v965 = vpop.f32.mrb[0].mxu0
      %v966 = vadd.f32 0.0, %v965
      %967 = vmatprep.mubr.f32.mxu0 0.0
      %968 = vmatmul.mubr.f32.gmra.mrb[0].mxu0 %v439
      %v969 = vpop.f32.mrb[0].mxu0
      %v970 = vadd.f32 0.0, %v969
      %v971 = vpop.f32.mrb[0].mxu0
      %v972 = vadd.f32 0.0, %v971
      %973 = vmatprep.mubr.f32.mxu0 0.0
      %974 = vmatmul.mubr.f32.gmra.mrb[0].mxu0 %v442
      %v975 = vpop.f32.mrb[0].mxu0
      %v976 = vadd.f32 0.0, %v975
      %v977 = vpop.f32.mrb[0].mxu0
      %v978 = vadd.f32 0.0, %v977
      %979 = vmatprep.mubr.f32.mxu0 0.0
      %980 = vmatmul.mubr.f32.gmra.mrb[0].mxu0 %v445
      %v981 = vpop.f32.mrb[0].mxu0
      %v982 = vadd.f32 0.0, %v981
      %v983 = vpop.f32.mrb[0].mxu0
      %v984 = vadd.f32 0.0, %v983
      %985 = vmatprep.mubr.f32.mxu0 0.0
      %986 = vmatmul.mubr.f32.gmra.mrb[0].mxu0 %v448
      %v987 = vpop.f32.mrb[0].mxu0
      %v988 = vadd.f32 0.0, %v987
      %v989 = vpop.f32.mrb[0].mxu0
      %v990 = vadd.f32 0.0, %v989
      %991 = vmatprep.mubr.f32.mxu0 0.0
      %992 = vmatmul.mubr.f32.gmra.mrb[0].mxu0 %v451
      %v993 = vpop.f32.mrb[0].mxu0
      %v994 = vadd.f32 0.0, %v993
      %v995 = vpop.f32.mrb[0].mxu0
      %v996 = vadd.f32 0.0, %v995
      %997 = vdwg.mxu0
      %v998 = vmul.f32 %v164, %v164
      %v999 = vmul.f32 %v165, %v165
      %v1000 = vmul.f32 %v166, %v166
      %v1001 = vmul.f32 %v167, %v167
      %v1002 = vmul.f32 %v168, %v168
      %v1003 = vmul.f32 %v169, %v169
      %v1004 = vmul.f32 %v170, %v170
      %v1005 = vmul.f32 %v171, %v171
      %v1006 = vmul.f32 %v172, %v172
      %v1007 = vmul.f32 %v173, %v173
      %v1008 = vmul.f32 %v174, %v174
      %v1009 = vmul.f32 %v175, %v175
      %v1010 = vmul.f32 %v176, %v176
      %v1011 = vmul.f32 %v177, %v177
      %v1012 = vmul.f32 %v178, %v178
      %v1013 = vmul.f32 %v179, %v179
      %v1014 = vmul.f32 %v180, %v180
      %v1015 = vmul.f32 %v181, %v181
      %v1016 = vmul.f32 %v182, %v182
      %v1017 = vmul.f32 %v183, %v183
      %v1018 = vmul.f32 %v184, %v184
      %v1019 = vmul.f32 %v185, %v185
      %v1020 = vmul.f32 %v186, %v186
      %v1021 = vmul.f32 %v187, %v187
      %v1022 = vmul.f32 %v188, %v188
      %v1023 = vmul.f32 %v189, %v189
      %v1024 = vmul.f32 %v190, %v190
      %v1025 = vmul.f32 %v191, %v191
      %v1026 = vmul.f32 %v192, %v192
      %v1027 = vmul.f32 %v193, %v193
      %v1028 = vmul.f32 %v194, %v194
      %v1029 = vmul.f32 %v195, %v195
      %v1030 = vmul.f32 %v196, %v196
      %v1031 = vmul.f32 %v197, %v197
      %v1032 = vmul.f32 %v198, %v198
      %v1033 = vmul.f32 %v199, %v199
      %v1034 = vmul.f32 %v200, %v200
      %v1035 = vmul.f32 %v201, %v201
      %v1036 = vmul.f32 %v202, %v202
      %v1037 = vmul.f32 %v203, %v203
      %v1038 = vmul.f32 %v204, %v204
      %v1039 = vmul.f32 %v205, %v205
      %v1040 = vmul.f32 %v206, %v206
      %v1041 = vmul.f32 %v207, %v207
      %v1042 = vmul.f32 %v208, %v208
      %v1043 = vmul.f32 %v209, %v209
      %v1044 = vmul.f32 %v210, %v210
      %v1045 = vmul.f32 %v211, %v211
      %v1046 = vmul.f32 %v212, %v212
      %v1047 = vmul.f32 %v213, %v213
      %v1048 = vmul.f32 %v214, %v214
      %v1049 = vmul.f32 %v215, %v215
      %v1050 = vmul.f32 %v216, %v216
      %v1051 = vmul.f32 %v217, %v217
      %v1052 = vmul.f32 %v218, %v218
      %v1053 = vmul.f32 %v219, %v219
      %v1054 = vmul.f32 %v220, %v220
      %v1055 = vmul.f32 %v221, %v221
      %v1056 = vmul.f32 %v222, %v222
      %v1057 = vmul.f32 %v223, %v223
      %v1058 = vmul.f32 %v224, %v224
      %v1059 = vmul.f32 %v225, %v225
      %v1060 = vmul.f32 %v226, %v226
      %v1061 = vmul.f32 %v227, %v227
      %v1062 = vsel %vm260, %v998, 0.0
      %1063 = vadd.xlane.f32.xlu0 %v1062
      %v1064 = vpop.xlane.xlu0 %1063
      %v1065 = vsel %vm260, %v999, 0.0
      %1066 = vadd.xlane.f32.xlu0 %v1065
      %v1067 = vpop.xlane.xlu0 %1066
      %v1068 = vsel %vm260, %v1000, 0.0
      %1069 = vadd.xlane.f32.xlu0 %v1068
      %v1070 = vpop.xlane.xlu0 %1069
      %v1071 = vsel %vm260, %v1001, 0.0
      %1072 = vadd.xlane.f32.xlu0 %v1071
      %v1073 = vpop.xlane.xlu0 %1072
      %v1074 = vsel %vm260, %v1002, 0.0
      %1075 = vadd.xlane.f32.xlu0 %v1074
      %v1076 = vpop.xlane.xlu0 %1075
      %v1077 = vsel %vm260, %v1003, 0.0
      %1078 = vadd.xlane.f32.xlu0 %v1077
      %v1079 = vpop.xlane.xlu0 %1078
      %v1080 = vsel %vm260, %v1004, 0.0
      %1081 = vadd.xlane.f32.xlu0 %v1080
      %v1082 = vpop.xlane.xlu0 %1081
      %v1083 = vsel %vm260, %v1005, 0.0
      %1084 = vadd.xlane.f32.xlu0 %v1083
      %v1085 = vpop.xlane.xlu0 %1084
      %v1086 = vsel %vm260, %v1006, 0.0
      %1087 = vadd.xlane.f32.xlu0 %v1086
      %v1088 = vpop.xlane.xlu0 %1087
      %v1089 = vsel %vm260, %v1007, 0.0
      %1090 = vadd.xlane.f32.xlu0 %v1089
      %v1091 = vpop.xlane.xlu0 %1090
      %v1092 = vsel %vm260, %v1008, 0.0
      %1093 = vadd.xlane.f32.xlu0 %v1092
      %v1094 = vpop.xlane.xlu0 %1093
      %v1095 = vsel %vm260, %v1009, 0.0
      %1096 = vadd.xlane.f32.xlu0 %v1095
      %v1097 = vpop.xlane.xlu0 %1096
      %v1098 = vsel %vm260, %v1010, 0.0
      %1099 = vadd.xlane.f32.xlu0 %v1098
      %v1100 = vpop.xlane.xlu0 %1099
      %v1101 = vsel %vm260, %v1011, 0.0
      %1102 = vadd.xlane.f32.xlu0 %v1101
      %v1103 = vpop.xlane.xlu0 %1102
      %v1104 = vsel %vm260, %v1012, 0.0
      %1105 = vadd.xlane.f32.xlu0 %v1104
      %v1106 = vpop.xlane.xlu0 %1105
      %v1107 = vsel %vm260, %v1013, 0.0
      %1108 = vadd.xlane.f32.xlu0 %v1107
      %v1109 = vpop.xlane.xlu0 %1108
      %v1110 = vsel %vm260, %v1014, 0.0
      %1111 = vadd.xlane.f32.xlu0 %v1110
      %v1112 = vpop.xlane.xlu0 %1111
      %v1113 = vsel %vm260, %v1015, 0.0
      %1114 = vadd.xlane.f32.xlu0 %v1113
      %v1115 = vpop.xlane.xlu0 %1114
      %v1116 = vsel %vm260, %v1016, 0.0
      %1117 = vadd.xlane.f32.xlu0 %v1116
      %v1118 = vpop.xlane.xlu0 %1117
      %v1119 = vsel %vm260, %v1017, 0.0
      %1120 = vadd.xlane.f32.xlu0 %v1119
      %v1121 = vpop.xlane.xlu0 %1120
      %v1122 = vsel %vm260, %v1018, 0.0
      %1123 = vadd.xlane.f32.xlu0 %v1122
      %v1124 = vpop.xlane.xlu0 %1123
      %v1125 = vsel %vm260, %v1019, 0.0
      %1126 = vadd.xlane.f32.xlu0 %v1125
      %v1127 = vpop.xlane.xlu0 %1126
      %v1128 = vsel %vm260, %v1020, 0.0
      %1129 = vadd.xlane.f32.xlu0 %v1128
      %v1130 = vpop.xlane.xlu0 %1129
      %v1131 = vsel %vm260, %v1021, 0.0
      %1132 = vadd.xlane.f32.xlu0 %v1131
      %v1133 = vpop.xlane.xlu0 %1132
      %v1134 = vsel %vm260, %v1022, 0.0
      %1135 = vadd.xlane.f32.xlu0 %v1134
      %v1136 = vpop.xlane.xlu0 %1135
      %v1137 = vsel %vm260, %v1023, 0.0
      %1138 = vadd.xlane.f32.xlu0 %v1137
      %v1139 = vpop.xlane.xlu0 %1138
      %v1140 = vsel %vm260, %v1024, 0.0
      %1141 = vadd.xlane.f32.xlu0 %v1140
      %v1142 = vpop.xlane.xlu0 %1141
      %v1143 = vsel %vm260, %v1025, 0.0
      %1144 = vadd.xlane.f32.xlu0 %v1143
      %v1145 = vpop.xlane.xlu0 %1144
      %v1146 = vsel %vm260, %v1026, 0.0
      %1147 = vadd.xlane.f32.xlu0 %v1146
      %v1148 = vpop.xlane.xlu0 %1147
      %v1149 = vsel %vm260, %v1027, 0.0
      %1150 = vadd.xlane.f32.xlu0 %v1149
      %v1151 = vpop.xlane.xlu0 %1150
      %v1152 = vsel %vm260, %v1028, 0.0
      %1153 = vadd.xlane.f32.xlu0 %v1152
      %v1154 = vpop.xlane.xlu0 %1153
      %v1155 = vsel %vm260, %v1029, 0.0
      %1156 = vadd.xlane.f32.xlu0 %v1155
      %v1157 = vpop.xlane.xlu0 %1156
      %v1158 = vsel %vm260, %v1030, 0.0
      %1159 = vadd.xlane.f32.xlu0 %v1158
      %v1160 = vpop.xlane.xlu0 %1159
      %v1161 = vsel %vm260, %v1031, 0.0
      %1162 = vadd.xlane.f32.xlu0 %v1161
      %v1163 = vpop.xlane.xlu0 %1162
      %v1164 = vsel %vm260, %v1032, 0.0
      %1165 = vadd.xlane.f32.xlu0 %v1164
      %v1166 = vpop.xlane.xlu0 %1165
      %v1167 = vsel %vm260, %v1033, 0.0
      %1168 = vadd.xlane.f32.xlu0 %v1167
      %v1169 = vpop.xlane.xlu0 %1168
      %v1170 = vsel %vm260, %v1034, 0.0
      %1171 = vadd.xlane.f32.xlu0 %v1170
      %v1172 = vpop.xlane.xlu0 %1171
      %v1173 = vsel %vm260, %v1035, 0.0
      %1174 = vadd.xlane.f32.xlu0 %v1173
      %v1175 = vpop.xlane.xlu0 %1174
      %v1176 = vsel %vm260, %v1036, 0.0
      %1177 = vadd.xlane.f32.xlu0 %v1176
      %v1178 = vpop.xlane.xlu0 %1177
      %v1179 = vsel %vm260, %v1037, 0.0
      %1180 = vadd.xlane.f32.xlu0 %v1179
      %v1181 = vpop.xlane.xlu0 %1180
      %v1182 = vsel %vm260, %v1038, 0.0
      %1183 = vadd.xlane.f32.xlu0 %v1182
      %v1184 = vpop.xlane.xlu0 %1183
      %v1185 = vsel %vm260, %v1039, 0.0
      %1186 = vadd.xlane.f32.xlu0 %v1185
      %v1187 = vpop.xlane.xlu0 %1186
      %v1188 = vsel %vm260, %v1040, 0.0
      %1189 = vadd.xlane.f32.xlu0 %v1188
      %v1190 = vpop.xlane.xlu0 %1189
      %v1191 = vsel %vm260, %v1041, 0.0
      %1192 = vadd.xlane.f32.xlu0 %v1191
      %v1193 = vpop.xlane.xlu0 %1192
      %v1194 = vsel %vm260, %v1042, 0.0
      %1195 = vadd.xlane.f32.xlu0 %v1194
      %v1196 = vpop.xlane.xlu0 %1195
      %v1197 = vsel %vm260, %v1043, 0.0
      %1198 = vadd.xlane.f32.xlu0 %v1197
      %v1199 = vpop.xlane.xlu0 %1198
      %v1200 = vsel %vm260, %v1044, 0.0
      %1201 = vadd.xlane.f32.xlu0 %v1200
      %v1202 = vpop.xlane.xlu0 %1201
      %v1203 = vsel %vm260, %v1045, 0.0
      %1204 = vadd.xlane.f32.xlu0 %v1203
      %v1205 = vpop.xlane.xlu0 %1204
      %v1206 = vsel %vm260, %v1046, 0.0
      %1207 = vadd.xlane.f32.xlu0 %v1206
      %v1208 = vpop.xlane.xlu0 %1207
      %v1209 = vsel %vm260, %v1047, 0.0
      %1210 = vadd.xlane.f32.xlu0 %v1209
      %v1211 = vpop.xlane.xlu0 %1210
      %v1212 = vsel %vm260, %v1048, 0.0
      %1213 = vadd.xlane.f32.xlu0 %v1212
      %v1214 = vpop.xlane.xlu0 %1213
      %v1215 = vsel %vm260, %v1049, 0.0
      %1216 = vadd.xlane.f32.xlu0 %v1215
      %v1217 = vpop.xlane.xlu0 %1216
      %v1218 = vsel %vm260, %v1050, 0.0
      %1219 = vadd.xlane.f32.xlu0 %v1218
      %v1220 = vpop.xlane.xlu0 %1219
      %v1221 = vsel %vm260, %v1051, 0.0
      %1222 = vadd.xlane.f32.xlu0 %v1221
      %v1223 = vpop.xlane.xlu0 %1222
      %v1224 = vsel %vm260, %v1052, 0.0
      %1225 = vadd.xlane.f32.xlu0 %v1224
      %v1226 = vpop.xlane.xlu0 %1225
      %v1227 = vsel %vm260, %v1053, 0.0
      %1228 = vadd.xlane.f32.xlu0 %v1227
      %v1229 = vpop.xlane.xlu0 %1228
      %v1230 = vsel %vm260, %v1054, 0.0
      %1231 = vadd.xlane.f32.xlu0 %v1230
      %v1232 = vpop.xlane.xlu0 %1231
      %v1233 = vsel %vm260, %v1055, 0.0
      %1234 = vadd.xlane.f32.xlu0 %v1233
      %v1235 = vpop.xlane.xlu0 %1234
      %v1236 = vsel %vm260, %v1056, 0.0
      %1237 = vadd.xlane.f32.xlu0 %v1236
      %v1238 = vpop.xlane.xlu0 %1237
      %v1239 = vsel %vm260, %v1057, 0.0
      %1240 = vadd.xlane.f32.xlu0 %v1239
      %v1241 = vpop.xlane.xlu0 %1240
      %v1242 = vsel %vm260, %v1058, 0.0
      %1243 = vadd.xlane.f32.xlu0 %v1242
      %v1244 = vpop.xlane.xlu0 %1243
      %v1245 = vsel %vm260, %v1059, 0.0
      %1246 = vadd.xlane.f32.xlu0 %v1245
      %v1247 = vpop.xlane.xlu0 %1246
      %v1248 = vsel %vm260, %v1060, 0.0
      %1249 = vadd.xlane.f32.xlu0 %v1248
      %v1250 = vpop.xlane.xlu0 %1249
      %v1251 = vsel %vm260, %v1061, 0.0
      %1252 = vadd.xlane.f32.xlu0 %v1251
      %v1253 = vpop.xlane.xlu0 %1252
      %v1254 = vmul.f32 %v228, %v228
      %v1255 = vmul.f32 %v229, %v229
      %v1256 = vmul.f32 %v230, %v230
      %v1257 = vmul.f32 %v231, %v231
      %v1258 = vmul.f32 %v232, %v232
      %v1259 = vmul.f32 %v233, %v233
      %v1260 = vmul.f32 %v234, %v234
      %v1261 = vmul.f32 %v235, %v235
      %v1262 = vmul.f32 %v236, %v236
      %v1263 = vmul.f32 %v237, %v237
      %v1264 = vmul.f32 %v238, %v238
      %v1265 = vmul.f32 %v239, %v239
      %v1266 = vmul.f32 %v240, %v240
      %v1267 = vmul.f32 %v241, %v241
      %v1268 = vmul.f32 %v242, %v242
      %v1269 = vmul.f32 %v243, %v243
      %v1270 = vmul.f32 %v244, %v244
      %v1271 = vmul.f32 %v245, %v245
      %v1272 = vmul.f32 %v246, %v246
      %v1273 = vmul.f32 %v247, %v247
      %v1274 = vmul.f32 %v248, %v248
      %v1275 = vmul.f32 %v249, %v249
      %v1276 = vmul.f32 %v250, %v250
      %v1277 = vmul.f32 %v251, %v251
      %v1278 = vmul.f32 %v252, %v252
      %v1279 = vmul.f32 %v253, %v253
      %v1280 = vmul.f32 %v254, %v254
      %v1281 = vmul.f32 %v255, %v255
      %v1282 = vmul.f32 %v256, %v256
      %v1283 = vmul.f32 %v257, %v257
      %v1284 = vmul.f32 %v258, %v258
      %v1285 = vmul.f32 %v259, %v259
      %v1286 = vsel %vm260, %v1254, 0.0
      %1287 = vadd.xlane.f32.xlu0 %v1286
      %v1288 = vpop.xlane.xlu0 %1287
      %v1289 = vsel %vm260, %v1255, 0.0
      %1290 = vadd.xlane.f32.xlu0 %v1289
      %v1291 = vpop.xlane.xlu0 %1290
      %v1292 = vsel %vm260, %v1256, 0.0
      %1293 = vadd.xlane.f32.xlu0 %v1292
      %v1294 = vpop.xlane.xlu0 %1293
      %v1295 = vsel %vm260, %v1257, 0.0
      %1296 = vadd.xlane.f32.xlu0 %v1295
      %v1297 = vpop.xlane.xlu0 %1296
      %v1298 = vsel %vm260, %v1258, 0.0
      %1299 = vadd.xlane.f32.xlu0 %v1298
      %v1300 = vpop.xlane.xlu0 %1299
      %v1301 = vsel %vm260, %v1259, 0.0
      %1302 = vadd.xlane.f32.xlu0 %v1301
      %v1303 = vpop.xlane.xlu0 %1302
      %v1304 = vsel %vm260, %v1260, 0.0
      %1305 = vadd.xlane.f32.xlu0 %v1304
      %v1306 = vpop.xlane.xlu0 %1305
      %v1307 = vsel %vm260, %v1261, 0.0
      %1308 = vadd.xlane.f32.xlu0 %v1307
      %v1309 = vpop.xlane.xlu0 %1308
      %v1310 = vsel %vm260, %v1262, 0.0
      %1311 = vadd.xlane.f32.xlu0 %v1310
      %v1312 = vpop.xlane.xlu0 %1311
      %v1313 = vsel %vm260, %v1263, 0.0
      %1314 = vadd.xlane.f32.xlu0 %v1313
      %v1315 = vpop.xlane.xlu0 %1314
      %v1316 = vsel %vm260, %v1264, 0.0
      %1317 = vadd.xlane.f32.xlu0 %v1316
      %v1318 = vpop.xlane.xlu0 %1317
      %v1319 = vsel %vm260, %v1265, 0.0
      %1320 = vadd.xlane.f32.xlu0 %v1319
      %v1321 = vpop.xlane.xlu0 %1320
      %v1322 = vsel %vm260, %v1266, 0.0
      %1323 = vadd.xlane.f32.xlu0 %v1322
      %v1324 = vpop.xlane.xlu0 %1323
      %v1325 = vsel %vm260, %v1267, 0.0
      %1326 = vadd.xlane.f32.xlu0 %v1325
      %v1327 = vpop.xlane.xlu0 %1326
      %v1328 = vsel %vm260, %v1268, 0.0
      %1329 = vadd.xlane.f32.xlu0 %v1328
      %v1330 = vpop.xlane.xlu0 %1329
      %v1331 = vsel %vm260, %v1269, 0.0
      %1332 = vadd.xlane.f32.xlu0 %v1331
      %v1333 = vpop.xlane.xlu0 %1332
      %v1334 = vsel %vm260, %v1270, 0.0
      %1335 = vadd.xlane.f32.xlu0 %v1334
      %v1336 = vpop.xlane.xlu0 %1335
      %v1337 = vsel %vm260, %v1271, 0.0
      %1338 = vadd.xlane.f32.xlu0 %v1337
      %v1339 = vpop.xlane.xlu0 %1338
      %v1340 = vsel %vm260, %v1272, 0.0
      %1341 = vadd.xlane.f32.xlu0 %v1340
      %v1342 = vpop.xlane.xlu0 %1341
      %v1343 = vsel %vm260, %v1273, 0.0
      %1344 = vadd.xlane.f32.xlu0 %v1343
      %v1345 = vpop.xlane.xlu0 %1344
      %v1346 = vsel %vm260, %v1274, 0.0
      %1347 = vadd.xlane.f32.xlu0 %v1346
      %v1348 = vpop.xlane.xlu0 %1347
      %v1349 = vsel %vm260, %v1275, 0.0
      %1350 = vadd.xlane.f32.xlu0 %v1349
      %v1351 = vpop.xlane.xlu0 %1350
      %v1352 = vsel %vm260, %v1276, 0.0
      %1353 = vadd.xlane.f32.xlu0 %v1352
      %v1354 = vpop.xlane.xlu0 %1353
      %v1355 = vsel %vm260, %v1277, 0.0
      %1356 = vadd.xlane.f32.xlu0 %v1355
      %v1357 = vpop.xlane.xlu0 %1356
      %v1358 = vsel %vm260, %v1278, 0.0
      %1359 = vadd.xlane.f32.xlu0 %v1358
      %v1360 = vpop.xlane.xlu0 %1359
      %v1361 = vsel %vm260, %v1279, 0.0
      %1362 = vadd.xlane.f32.xlu0 %v1361
      %v1363 = vpop.xlane.xlu0 %1362
      %v1364 = vsel %vm260, %v1280, 0.0
      %1365 = vadd.xlane.f32.xlu0 %v1364
      %v1366 = vpop.xlane.xlu0 %1365
      %v1367 = vsel %vm260, %v1281, 0.0
      %1368 = vadd.xlane.f32.xlu0 %v1367
      %v1369 = vpop.xlane.xlu0 %1368
      %v1370 = vsel %vm260, %v1282, 0.0
      %1371 = vadd.xlane.f32.xlu0 %v1370
      %v1372 = vpop.xlane.xlu0 %1371
      %v1373 = vsel %vm260, %v1283, 0.0
      %1374 = vadd.xlane.f32.xlu0 %v1373
      %v1375 = vpop.xlane.xlu0 %1374
      %v1376 = vsel %vm260, %v1284, 0.0
      %1377 = vadd.xlane.f32.xlu0 %v1376
      %v1378 = vpop.xlane.xlu0 %1377
      %v1379 = vsel %vm260, %v1285, 0.0
      %1380 = vadd.xlane.f32.xlu0 %v1379
      %v1381 = vpop.xlane.xlu0 %1380
      %v1414 = vlaneseq
      %v1415 = vand.u32 %v1414, 127
      %v1416 = vlaneseq
      %v1417 = vshrl.u32 %v1416, 7
      %v1418 = vsub.s32 %v1415, %v1417
      %v1419 = vrot.slane %v1288, %v1418
      %v1420 = vadd.s32 %v1415, 4294967288
      %v1421 = vlaneseq
      %v1422 = vshrl.u32 %v1421, 7
      %v1423 = vsub.s32 %v1420, %v1422
      %v1424 = vrot.slane %v1291, %v1423
      %vm1425 = vcmask 130112
      %v1426 = vsel %vm1425, %v1424, %v1419
      %v1427 = vadd.s32 %v1415, 4294967280
      %v1428 = vlaneseq
      %v1429 = vshrl.u32 %v1428, 7
      %v1430 = vsub.s32 %v1427, %v1429
      %v1431 = vrot.slane %v1294, %v1430
      %vm1432 = vcmask 195712
      %v1433 = vsel %vm1432, %v1431, %v1426
      %v1434 = vadd.s32 %v1415, 4294967272
      %v1435 = vlaneseq
      %v1436 = vshrl.u32 %v1435, 7
      %v1437 = vsub.s32 %v1434, %v1436
      %v1438 = vrot.slane %v1297, %v1437
      %vm1439 = vcmask 261312
      %v1440 = vsel %vm1439, %v1438, %v1433
      %v1441 = vadd.s32 %v1415, 4294967264
      %v1442 = vlaneseq
      %v1443 = vshrl.u32 %v1442, 7
      %v1444 = vsub.s32 %v1441, %v1443
      %v1445 = vrot.slane %v1300, %v1444
      %vm1446 = vcmask 326912
      %v1447 = vsel %vm1446, %v1445, %v1440
      %v1448 = vadd.s32 %v1415, 4294967256
      %v1449 = vlaneseq
      %v1450 = vshrl.u32 %v1449, 7
      %v1451 = vsub.s32 %v1448, %v1450
      %v1452 = vrot.slane %v1303, %v1451
      %vm1453 = vcmask 392512
      %v1454 = vsel %vm1453, %v1452, %v1447
      %v1455 = vadd.s32 %v1415, 4294967248
      %v1456 = vlaneseq
      %v1457 = vshrl.u32 %v1456, 7
      %v1458 = vsub.s32 %v1455, %v1457
      %v1459 = vrot.slane %v1306, %v1458
      %vm1460 = vcmask 458112
      %v1461 = vsel %vm1460, %v1459, %v1454
      %v1462 = vadd.s32 %v1415, 4294967240
      %v1463 = vlaneseq
      %v1464 = vshrl.u32 %v1463, 7
      %v1465 = vsub.s32 %v1462, %v1464
      %v1466 = vrot.slane %v1309, %v1465
      %vm1467 = vcmask 523712
      %v1468 = vsel %vm1467, %v1466, %v1461
      %v1469 = vadd.s32 %v1415, 4294967232
      %v1470 = vlaneseq
      %v1471 = vshrl.u32 %v1470, 7
      %v1472 = vsub.s32 %v1469, %v1471
      %v1473 = vrot.slane %v1312, %v1472
      %vm1474 = vcmask 589312
      %v1475 = vsel %vm1474, %v1473, %v1468
      %v1476 = vadd.s32 %v1415, 4294967224
      %v1477 = vlaneseq
      %v1478 = vshrl.u32 %v1477, 7
      %v1479 = vsub.s32 %v1476, %v1478
      %v1480 = vrot.slane %v1315, %v1479
      %vm1481 = vcmask 654912
      %v1482 = vsel %vm1481, %v1480, %v1475
      %v1483 = vadd.s32 %v1415, 4294967216
      %v1484 = vlaneseq
      %v1485 = vshrl.u32 %v1484, 7
      %v1486 = vsub.s32 %v1483, %v1485
      %v1487 = vrot.slane %v1318, %v1486
      %vm1488 = vcmask 720512
      %v1489 = vsel %vm1488, %v1487, %v1482
      %v1490 = vadd.s32 %v1415, 4294967208
      %v1491 = vlaneseq
      %v1492 = vshrl.u32 %v1491, 7
      %v1493 = vsub.s32 %v1490, %v1492
      %v1494 = vrot.slane %v1321, %v1493
      %vm1495 = vcmask 786112
      %v1496 = vsel %vm1495, %v1494, %v1489
      %v1497 = vadd.s32 %v1415, 4294967200
      %v1498 = vlaneseq
      %v1499 = vshrl.u32 %v1498, 7
      %v1500 = vsub.s32 %v1497, %v1499
      %v1501 = vrot.slane %v1324, %v1500
      %vm1502 = vcmask 851712
      %v1503 = vsel %vm1502, %v1501, %v1496
      %v1504 = vadd.s32 %v1415, 4294967192
      %v1505 = vlaneseq
      %v1506 = vshrl.u32 %v1505, 7
      %v1507 = vsub.s32 %v1504, %v1506
      %v1508 = vrot.slane %v1327, %v1507
      %vm1509 = vcmask 917312
      %v1510 = vsel %vm1509, %v1508, %v1503
      %v1511 = vadd.s32 %v1415, 4294967184
      %v1512 = vlaneseq
      %v1513 = vshrl.u32 %v1512, 7
      %v1514 = vsub.s32 %v1511, %v1513
      %v1515 = vrot.slane %v1330, %v1514
      %vm1516 = vcmask 982912
      %v1517 = vsel %vm1516, %v1515, %v1510
      %v1518 = vadd.s32 %v1415, 4294967176
      %v1519 = vlaneseq
      %v1520 = vshrl.u32 %v1519, 7
      %v1521 = vsub.s32 %v1518, %v1520
      %v1522 = vrot.slane %v1333, %v1521
      %vm1523 = vcmask 1048512
      %v1524 = vsel %vm1523, %v1522, %v1517
      %v1525 = vlaneseq
      %v1526 = vshrl.u32 %v1525, 7
      %v1527 = vsub.s32 %v1415, %v1526
      %v1528 = vrot.slane %v1336, %v1527
      %v1529 = vlaneseq
      %v1530 = vshrl.u32 %v1529, 7
      %v1531 = vsub.s32 %v1420, %v1530
      %v1532 = vrot.slane %v1339, %v1531
      %v1533 = vsel %vm1425, %v1532, %v1528
      %v1534 = vlaneseq
      %v1535 = vshrl.u32 %v1534, 7
      %v1536 = vsub.s32 %v1427, %v1535
      %v1537 = vrot.slane %v1342, %v1536
      %v1538 = vsel %vm1432, %v1537, %v1533
      %v1539 = vlaneseq
      %v1540 = vshrl.u32 %v1539, 7
      %v1541 = vsub.s32 %v1434, %v1540
      %v1542 = vrot.slane %v1345, %v1541
      %v1543 = vsel %vm1439, %v1542, %v1538
      %v1544 = vlaneseq
      %v1545 = vshrl.u32 %v1544, 7
      %v1546 = vsub.s32 %v1441, %v1545
      %v1547 = vrot.slane %v1348, %v1546
      %v1548 = vsel %vm1446, %v1547, %v1543
      %v1549 = vlaneseq
      %v1550 = vshrl.u32 %v1549, 7
      %v1551 = vsub.s32 %v1448, %v1550
      %v1552 = vrot.slane %v1351, %v1551
      %v1553 = vsel %vm1453, %v1552, %v1548
      %v1554 = vlaneseq
      %v1555 = vshrl.u32 %v1554, 7
      %v1556 = vsub.s32 %v1455, %v1555
      %v1557 = vrot.slane %v1354, %v1556
      %v1558 = vsel %vm1460, %v1557, %v1553
      %v1559 = vlaneseq
      %v1560 = vshrl.u32 %v1559, 7
      %v1561 = vsub.s32 %v1462, %v1560
      %v1562 = vrot.slane %v1357, %v1561
      %v1563 = vsel %vm1467, %v1562, %v1558
      %v1564 = vlaneseq
      %v1565 = vshrl.u32 %v1564, 7
      %v1566 = vsub.s32 %v1469, %v1565
      %v1567 = vrot.slane %v1360, %v1566
      %v1568 = vsel %vm1474, %v1567, %v1563
      %v1569 = vlaneseq
      %v1570 = vshrl.u32 %v1569, 7
      %v1571 = vsub.s32 %v1476, %v1570
      %v1572 = vrot.slane %v1363, %v1571
      %v1573 = vsel %vm1481, %v1572, %v1568
      %v1574 = vlaneseq
      %v1575 = vshrl.u32 %v1574, 7
      %v1576 = vsub.s32 %v1483, %v1575
      %v1577 = vrot.slane %v1366, %v1576
      %v1578 = vsel %vm1488, %v1577, %v1573
      %v1579 = vlaneseq
      %v1580 = vshrl.u32 %v1579, 7
      %v1581 = vsub.s32 %v1490, %v1580
      %v1582 = vrot.slane %v1369, %v1581
      %v1583 = vsel %vm1495, %v1582, %v1578
      %v1584 = vlaneseq
      %v1585 = vshrl.u32 %v1584, 7
      %v1586 = vsub.s32 %v1497, %v1585
      %v1587 = vrot.slane %v1372, %v1586
      %v1588 = vsel %vm1502, %v1587, %v1583
      %v1589 = vlaneseq
      %v1590 = vshrl.u32 %v1589, 7
      %v1591 = vsub.s32 %v1504, %v1590
      %v1592 = vrot.slane %v1375, %v1591
      %v1593 = vsel %vm1509, %v1592, %v1588
      %v1594 = vlaneseq
      %v1595 = vshrl.u32 %v1594, 7
      %v1596 = vsub.s32 %v1511, %v1595
      %v1597 = vrot.slane %v1378, %v1596
      %v1598 = vsel %vm1516, %v1597, %v1593
      %v1599 = vlaneseq
      %v1600 = vshrl.u32 %v1599, 7
      %v1601 = vsub.s32 %v1518, %v1600
      %v1602 = vrot.slane %v1381, %v1601
      %v1603 = vsel %vm1523, %v1602, %v1598
      %vm1604 = vcmask 1042434
      %v1605 = vsel %vm1604, %v1524, %v1524
      %vm1606 = vcmask 1043459
      %v1607 = vsel %vm1606, %v1524, %v1605
      %vm1608 = vcmask 1044484
      %v1609 = vsel %vm1608, %v1524, %v1607
      %vm1610 = vcmask 1045509
      %v1611 = vsel %vm1610, %v1524, %v1609
      %vm1612 = vcmask 1046534
      %v1613 = vsel %vm1612, %v1524, %v1611
      %vm1614 = vcmask 1047559
      %v1615 = vsel %vm1614, %v1524, %v1613
      %v1616 = vsel %vm1604, %v1603, %v1603
      %v1617 = vsel %vm1606, %v1603, %v1616
      %v1618 = vsel %vm1608, %v1603, %v1617
      %v1619 = vsel %vm1610, %v1603, %v1618
      %v1620 = vsel %vm1612, %v1603, %v1619
      %v1621 = vsel %vm1614, %v1603, %v1620
      %v1624 = vmul.f32 %v1064, %v1615
      %v1625 = vmul.f32 %v1064, %v1621
      %v1626 = vmul.f32 %v1067, %v1615
      %v1627 = vmul.f32 %v1067, %v1621
      %v1628 = vmul.f32 %v1070, %v1615
      %v1629 = vmul.f32 %v1070, %v1621
      %v1630 = vmul.f32 %v1073, %v1615
      %v1631 = vmul.f32 %v1073, %v1621
      %v1632 = vmul.f32 %v1076, %v1615
      %v1633 = vmul.f32 %v1076, %v1621
      %v1634 = vmul.f32 %v1079, %v1615
      %v1635 = vmul.f32 %v1079, %v1621
      %v1636 = vmul.f32 %v1082, %v1615
      %v1637 = vmul.f32 %v1082, %v1621
      %v1638 = vmul.f32 %v1085, %v1615
      %v1639 = vmul.f32 %v1085, %v1621
      %v1640 = vmul.f32 %v1088, %v1615
      %v1641 = vmul.f32 %v1088, %v1621
      %v1642 = vmul.f32 %v1091, %v1615
      %v1643 = vmul.f32 %v1091, %v1621
      %v1644 = vmul.f32 %v1094, %v1615
      %v1645 = vmul.f32 %v1094, %v1621
      %v1646 = vmul.f32 %v1097, %v1615
      %v1647 = vmul.f32 %v1097, %v1621
      %v1648 = vmul.f32 %v1100, %v1615
      %v1649 = vmul.f32 %v1100, %v1621
      %v1650 = vmul.f32 %v1103, %v1615
      %v1651 = vmul.f32 %v1103, %v1621
      %v1652 = vmul.f32 %v1106, %v1615
      %v1653 = vmul.f32 %v1106, %v1621
      %v1654 = vmul.f32 %v1109, %v1615
      %v1655 = vmul.f32 %v1109, %v1621
      %v1656 = vmul.f32 %v1112, %v1615
      %v1657 = vmul.f32 %v1112, %v1621
      %v1658 = vmul.f32 %v1115, %v1615
      %v1659 = vmul.f32 %v1115, %v1621
      %v1660 = vmul.f32 %v1118, %v1615
      %v1661 = vmul.f32 %v1118, %v1621
      %v1662 = vmul.f32 %v1121, %v1615
      %v1663 = vmul.f32 %v1121, %v1621
      %v1664 = vmul.f32 %v1124, %v1615
      %v1665 = vmul.f32 %v1124, %v1621
      %v1666 = vmul.f32 %v1127, %v1615
      %v1667 = vmul.f32 %v1127, %v1621
      %v1668 = vmul.f32 %v1130, %v1615
      %v1669 = vmul.f32 %v1130, %v1621
      %v1670 = vmul.f32 %v1133, %v1615
      %v1671 = vmul.f32 %v1133, %v1621
      %v1672 = vmul.f32 %v1136, %v1615
      %v1673 = vmul.f32 %v1136, %v1621
      %v1674 = vmul.f32 %v1139, %v1615
      %v1675 = vmul.f32 %v1139, %v1621
      %v1676 = vmul.f32 %v1142, %v1615
      %v1677 = vmul.f32 %v1142, %v1621
      %v1678 = vmul.f32 %v1145, %v1615
      %v1679 = vmul.f32 %v1145, %v1621
      %v1680 = vmul.f32 %v1148, %v1615
      %v1681 = vmul.f32 %v1148, %v1621
      %v1682 = vmul.f32 %v1151, %v1615
      %v1683 = vmul.f32 %v1151, %v1621
      %v1684 = vmul.f32 %v1154, %v1615
      %v1685 = vmul.f32 %v1154, %v1621
      %v1686 = vmul.f32 %v1157, %v1615
      %v1687 = vmul.f32 %v1157, %v1621
      %v1688 = vmul.f32 %v1160, %v1615
      %v1689 = vmul.f32 %v1160, %v1621
      %v1690 = vmul.f32 %v1163, %v1615
      %v1691 = vmul.f32 %v1163, %v1621
      %v1692 = vmul.f32 %v1166, %v1615
      %v1693 = vmul.f32 %v1166, %v1621
      %v1694 = vmul.f32 %v1169, %v1615
      %v1695 = vmul.f32 %v1169, %v1621
      %v1696 = vmul.f32 %v1172, %v1615
      %v1697 = vmul.f32 %v1172, %v1621
      %v1698 = vmul.f32 %v1175, %v1615
      %v1699 = vmul.f32 %v1175, %v1621
      %v1700 = vmul.f32 %v1178, %v1615
      %v1701 = vmul.f32 %v1178, %v1621
      %v1702 = vmul.f32 %v1181, %v1615
      %v1703 = vmul.f32 %v1181, %v1621
      %v1704 = vmul.f32 %v1184, %v1615
      %v1705 = vmul.f32 %v1184, %v1621
      %v1706 = vmul.f32 %v1187, %v1615
      %v1707 = vmul.f32 %v1187, %v1621
      %v1708 = vmul.f32 %v1190, %v1615
      %v1709 = vmul.f32 %v1190, %v1621
      %v1710 = vmul.f32 %v1193, %v1615
      %v1711 = vmul.f32 %v1193, %v1621
      %v1712 = vmul.f32 %v1196, %v1615
      %v1713 = vmul.f32 %v1196, %v1621
      %v1714 = vmul.f32 %v1199, %v1615
      %v1715 = vmul.f32 %v1199, %v1621
      %v1716 = vmul.f32 %v1202, %v1615
      %v1717 = vmul.f32 %v1202, %v1621
      %v1718 = vmul.f32 %v1205, %v1615
      %v1719 = vmul.f32 %v1205, %v1621
      %v1720 = vmul.f32 %v1208, %v1615
      %v1721 = vmul.f32 %v1208, %v1621
      %v1722 = vmul.f32 %v1211, %v1615
      %v1723 = vmul.f32 %v1211, %v1621
      %v1724 = vmul.f32 %v1214, %v1615
      %v1725 = vmul.f32 %v1214, %v1621
      %v1726 = vmul.f32 %v1217, %v1615
      %v1727 = vmul.f32 %v1217, %v1621
      %v1728 = vmul.f32 %v1220, %v1615
      %v1729 = vmul.f32 %v1220, %v1621
      %v1730 = vmul.f32 %v1223, %v1615
      %v1731 = vmul.f32 %v1223, %v1621
      %v1732 = vmul.f32 %v1226, %v1615
      %v1733 = vmul.f32 %v1226, %v1621
      %v1734 = vmul.f32 %v1229, %v1615
      %v1735 = vmul.f32 %v1229, %v1621
      %v1736 = vmul.f32 %v1232, %v1615
      %v1737 = vmul.f32 %v1232, %v1621
      %v1738 = vmul.f32 %v1235, %v1615
      %v1739 = vmul.f32 %v1235, %v1621
      %v1740 = vmul.f32 %v1238, %v1615
      %v1741 = vmul.f32 %v1238, %v1621
      %v1742 = vmul.f32 %v1241, %v1615
      %v1743 = vmul.f32 %v1241, %v1621
      %v1744 = vmul.f32 %v1244, %v1615
      %v1745 = vmul.f32 %v1244, %v1621
      %v1746 = vmul.f32 %v1247, %v1615
      %v1747 = vmul.f32 %v1247, %v1621
      %v1748 = vmul.f32 %v1250, %v1615
      %v1749 = vmul.f32 %v1250, %v1621
      %v1750 = vmul.f32 %v1253, %v1615
      %v1751 = vmul.f32 %v1253, %v1621
      %v1752 = vmax.f32 %v1624, 1e-16
      %v1753 = vmax.f32 %v1625, 1e-16
      %v1754 = vmax.f32 %v1626, 1e-16
      %v1755 = vmax.f32 %v1627, 1e-16
      %v1756 = vmax.f32 %v1628, 1e-16
      %v1757 = vmax.f32 %v1629, 1e-16
      %v1758 = vmax.f32 %v1630, 1e-16
      %v1759 = vmax.f32 %v1631, 1e-16
      %v1760 = vmax.f32 %v1632, 1e-16
      %v1761 = vmax.f32 %v1633, 1e-16
      %v1762 = vmax.f32 %v1634, 1e-16
      %v1763 = vmax.f32 %v1635, 1e-16
      %v1764 = vmax.f32 %v1636, 1e-16
      %v1765 = vmax.f32 %v1637, 1e-16
      %v1766 = vmax.f32 %v1638, 1e-16
      %v1767 = vmax.f32 %v1639, 1e-16
      %v1768 = vmax.f32 %v1640, 1e-16
      %v1769 = vmax.f32 %v1641, 1e-16
      %v1770 = vmax.f32 %v1642, 1e-16
      %v1771 = vmax.f32 %v1643, 1e-16
      %v1772 = vmax.f32 %v1644, 1e-16
      %v1773 = vmax.f32 %v1645, 1e-16
      %v1774 = vmax.f32 %v1646, 1e-16
      %v1775 = vmax.f32 %v1647, 1e-16
      %v1776 = vmax.f32 %v1648, 1e-16
      %v1777 = vmax.f32 %v1649, 1e-16
      %v1778 = vmax.f32 %v1650, 1e-16
      %v1779 = vmax.f32 %v1651, 1e-16
      %v1780 = vmax.f32 %v1652, 1e-16
      %v1781 = vmax.f32 %v1653, 1e-16
      %v1782 = vmax.f32 %v1654, 1e-16
      %v1783 = vmax.f32 %v1655, 1e-16
      %v1784 = vmax.f32 %v1656, 1e-16
      %v1785 = vmax.f32 %v1657, 1e-16
      %v1786 = vmax.f32 %v1658, 1e-16
      %v1787 = vmax.f32 %v1659, 1e-16
      %v1788 = vmax.f32 %v1660, 1e-16
      %v1789 = vmax.f32 %v1661, 1e-16
      %v1790 = vmax.f32 %v1662, 1e-16
      %v1791 = vmax.f32 %v1663, 1e-16
      %v1792 = vmax.f32 %v1664, 1e-16
      %v1793 = vmax.f32 %v1665, 1e-16
      %v1794 = vmax.f32 %v1666, 1e-16
      %v1795 = vmax.f32 %v1667, 1e-16
      %v1796 = vmax.f32 %v1668, 1e-16
      %v1797 = vmax.f32 %v1669, 1e-16
      %v1798 = vmax.f32 %v1670, 1e-16
      %v1799 = vmax.f32 %v1671, 1e-16
      %v1800 = vmax.f32 %v1672, 1e-16
      %v1801 = vmax.f32 %v1673, 1e-16
      %v1802 = vmax.f32 %v1674, 1e-16
      %v1803 = vmax.f32 %v1675, 1e-16
      %v1804 = vmax.f32 %v1676, 1e-16
      %v1805 = vmax.f32 %v1677, 1e-16
      %v1806 = vmax.f32 %v1678, 1e-16
      %v1807 = vmax.f32 %v1679, 1e-16
      %v1808 = vmax.f32 %v1680, 1e-16
      %v1809 = vmax.f32 %v1681, 1e-16
      %v1810 = vmax.f32 %v1682, 1e-16
      %v1811 = vmax.f32 %v1683, 1e-16
      %v1812 = vmax.f32 %v1684, 1e-16
      %v1813 = vmax.f32 %v1685, 1e-16
      %v1814 = vmax.f32 %v1686, 1e-16
      %v1815 = vmax.f32 %v1687, 1e-16
      %v1816 = vmax.f32 %v1688, 1e-16
      %v1817 = vmax.f32 %v1689, 1e-16
      %v1818 = vmax.f32 %v1690, 1e-16
      %v1819 = vmax.f32 %v1691, 1e-16
      %v1820 = vmax.f32 %v1692, 1e-16
      %v1821 = vmax.f32 %v1693, 1e-16
      %v1822 = vmax.f32 %v1694, 1e-16
      %v1823 = vmax.f32 %v1695, 1e-16
      %v1824 = vmax.f32 %v1696, 1e-16
      %v1825 = vmax.f32 %v1697, 1e-16
      %v1826 = vmax.f32 %v1698, 1e-16
      %v1827 = vmax.f32 %v1699, 1e-16
      %v1828 = vmax.f32 %v1700, 1e-16
      %v1829 = vmax.f32 %v1701, 1e-16
      %v1830 = vmax.f32 %v1702, 1e-16
      %v1831 = vmax.f32 %v1703, 1e-16
      %v1832 = vmax.f32 %v1704, 1e-16
      %v1833 = vmax.f32 %v1705, 1e-16
      %v1834 = vmax.f32 %v1706, 1e-16
      %v1835 = vmax.f32 %v1707, 1e-16
      %v1836 = vmax.f32 %v1708, 1e-16
      %v1837 = vmax.f32 %v1709, 1e-16
      %v1838 = vmax.f32 %v1710, 1e-16
      %v1839 = vmax.f32 %v1711, 1e-16
      %v1840 = vmax.f32 %v1712, 1e-16
      %v1841 = vmax.f32 %v1713, 1e-16
      %v1842 = vmax.f32 %v1714, 1e-16
      %v1843 = vmax.f32 %v1715, 1e-16
      %v1844 = vmax.f32 %v1716, 1e-16
      %v1845 = vmax.f32 %v1717, 1e-16
      %v1846 = vmax.f32 %v1718, 1e-16
      %v1847 = vmax.f32 %v1719, 1e-16
      %v1848 = vmax.f32 %v1720, 1e-16
      %v1849 = vmax.f32 %v1721, 1e-16
      %v1850 = vmax.f32 %v1722, 1e-16
      %v1851 = vmax.f32 %v1723, 1e-16
      %v1852 = vmax.f32 %v1724, 1e-16
      %v1853 = vmax.f32 %v1725, 1e-16
      %v1854 = vmax.f32 %v1726, 1e-16
      %v1855 = vmax.f32 %v1727, 1e-16
      %v1856 = vmax.f32 %v1728, 1e-16
      %v1857 = vmax.f32 %v1729, 1e-16
      %v1858 = vmax.f32 %v1730, 1e-16
      %v1859 = vmax.f32 %v1731, 1e-16
      %v1860 = vmax.f32 %v1732, 1e-16
      %v1861 = vmax.f32 %v1733, 1e-16
      %v1862 = vmax.f32 %v1734, 1e-16
      %v1863 = vmax.f32 %v1735, 1e-16
      %v1864 = vmax.f32 %v1736, 1e-16
      %v1865 = vmax.f32 %v1737, 1e-16
      %v1866 = vmax.f32 %v1738, 1e-16
      %v1867 = vmax.f32 %v1739, 1e-16
      %v1868 = vmax.f32 %v1740, 1e-16
      %v1869 = vmax.f32 %v1741, 1e-16
      %v1870 = vmax.f32 %v1742, 1e-16
      %v1871 = vmax.f32 %v1743, 1e-16
      %v1872 = vmax.f32 %v1744, 1e-16
      %v1873 = vmax.f32 %v1745, 1e-16
      %v1874 = vmax.f32 %v1746, 1e-16
      %v1875 = vmax.f32 %v1747, 1e-16
      %v1876 = vmax.f32 %v1748, 1e-16
      %v1877 = vmax.f32 %v1749, 1e-16
      %v1878 = vmax.f32 %v1750, 1e-16
      %v1879 = vmax.f32 %v1751, 1e-16
      %v1880 = vrsqrt.pop %v1752
      %v1881 = vrsqrt.pop %v1753
      %v1882 = vrsqrt.pop %v1754
      %v1883 = vrsqrt.pop %v1755
      %v1884 = vrsqrt.pop %v1756
      %v1885 = vrsqrt.pop %v1757
      %v1886 = vrsqrt.pop %v1758
      %v1887 = vrsqrt.pop %v1759
      %v1888 = vrsqrt.pop %v1760
      %v1889 = vrsqrt.pop %v1761
      %v1890 = vrsqrt.pop %v1762
      %v1891 = vrsqrt.pop %v1763
      %v1892 = vrsqrt.pop %v1764
      %v1893 = vrsqrt.pop %v1765
      %v1894 = vrsqrt.pop %v1766
      %v1895 = vrsqrt.pop %v1767
      %v1896 = vrsqrt.pop %v1768
      %v1897 = vrsqrt.pop %v1769
      %v1898 = vrsqrt.pop %v1770
      %v1899 = vrsqrt.pop %v1771
      %v1900 = vrsqrt.pop %v1772
      %v1901 = vrsqrt.pop %v1773
      %v1902 = vrsqrt.pop %v1774
      %v1903 = vrsqrt.pop %v1775
      %v1904 = vrsqrt.pop %v1776
      %v1905 = vrsqrt.pop %v1777
      %v1906 = vrsqrt.pop %v1778
      %v1907 = vrsqrt.pop %v1779
      %v1908 = vrsqrt.pop %v1780
      %v1909 = vrsqrt.pop %v1781
      %v1910 = vrsqrt.pop %v1782
      %v1911 = vrsqrt.pop %v1783
      %v1912 = vrsqrt.pop %v1784
      %v1913 = vrsqrt.pop %v1785
      %v1914 = vrsqrt.pop %v1786
      %v1915 = vrsqrt.pop %v1787
      %v1916 = vrsqrt.pop %v1788
      %v1917 = vrsqrt.pop %v1789
      %v1918 = vrsqrt.pop %v1790
      %v1919 = vrsqrt.pop %v1791
      %v1920 = vrsqrt.pop %v1792
      %v1921 = vrsqrt.pop %v1793
      %v1922 = vrsqrt.pop %v1794
      %v1923 = vrsqrt.pop %v1795
      %v1924 = vrsqrt.pop %v1796
      %v1925 = vrsqrt.pop %v1797
      %v1926 = vrsqrt.pop %v1798
      %v1927 = vrsqrt.pop %v1799
      %v1928 = vrsqrt.pop %v1800
      %v1929 = vrsqrt.pop %v1801
      %v1930 = vrsqrt.pop %v1802
      %v1931 = vrsqrt.pop %v1803
      %v1932 = vrsqrt.pop %v1804
      %v1933 = vrsqrt.pop %v1805
      %v1934 = vrsqrt.pop %v1806
      %v1935 = vrsqrt.pop %v1807
      %v1936 = vrsqrt.pop %v1808
      %v1937 = vrsqrt.pop %v1809
      %v1938 = vrsqrt.pop %v1810
      %v1939 = vrsqrt.pop %v1811
      %v1940 = vrsqrt.pop %v1812
      %v1941 = vrsqrt.pop %v1813
      %v1942 = vrsqrt.pop %v1814
      %v1943 = vrsqrt.pop %v1815
      %v1944 = vrsqrt.pop %v1816
      %v1945 = vrsqrt.pop %v1817
      %v1946 = vrsqrt.pop %v1818
      %v1947 = vrsqrt.pop %v1819
      %v1948 = vrsqrt.pop %v1820
      %v1949 = vrsqrt.pop %v1821
      %v1950 = vrsqrt.pop %v1822
      %v1951 = vrsqrt.pop %v1823
      %v1952 = vrsqrt.pop %v1824
      %v1953 = vrsqrt.pop %v1825
      %v1954 = vrsqrt.pop %v1826
      %v1955 = vrsqrt.pop %v1827
      %v1956 = vrsqrt.pop %v1828
      %v1957 = vrsqrt.pop %v1829
      %v1958 = vrsqrt.pop %v1830
      %v1959 = vrsqrt.pop %v1831
      %v1960 = vrsqrt.pop %v1832
      %v1961 = vrsqrt.pop %v1833
      %v1962 = vrsqrt.pop %v1834
      %v1963 = vrsqrt.pop %v1835
      %v1964 = vrsqrt.pop %v1836
      %v1965 = vrsqrt.pop %v1837
      %v1966 = vrsqrt.pop %v1838
      %v1967 = vrsqrt.pop %v1839
      %v1968 = vrsqrt.pop %v1840
      %v1969 = vrsqrt.pop %v1841
      %v1970 = vrsqrt.pop %v1842
      %v1971 = vrsqrt.pop %v1843
      %v1972 = vrsqrt.pop %v1844
      %v1973 = vrsqrt.pop %v1845
      %v1974 = vrsqrt.pop %v1846
      %v1975 = vrsqrt.pop %v1847
      %v1976 = vrsqrt.pop %v1848
      %v1977 = vrsqrt.pop %v1849
      %v1978 = vrsqrt.pop %v1850
      %v1979 = vrsqrt.pop %v1851
      %v1980 = vrsqrt.pop %v1852
      %v1981 = vrsqrt.pop %v1853
      %v1982 = vrsqrt.pop %v1854
      %v1983 = vrsqrt.pop %v1855
      %v1984 = vrsqrt.pop %v1856
      %v1985 = vrsqrt.pop %v1857
      %v1986 = vrsqrt.pop %v1858
      %v1987 = vrsqrt.pop %v1859
      %v1988 = vrsqrt.pop %v1860
      %v1989 = vrsqrt.pop %v1861
      %v1990 = vrsqrt.pop %v1862
      %v1991 = vrsqrt.pop %v1863
      %v1992 = vrsqrt.pop %v1864
      %v1993 = vrsqrt.pop %v1865
      %v1994 = vrsqrt.pop %v1866
      %v1995 = vrsqrt.pop %v1867
      %v1996 = vrsqrt.pop %v1868
      %v1997 = vrsqrt.pop %v1869
      %v1998 = vrsqrt.pop %v1870
      %v1999 = vrsqrt.pop %v1871
      %v2000 = vrsqrt.pop %v1872
      %v2001 = vrsqrt.pop %v1873
      %v2002 = vrsqrt.pop %v1874
      %v2003 = vrsqrt.pop %v1875
      %v2004 = vrsqrt.pop %v1876
      %v2005 = vrsqrt.pop %v1877
      %v2006 = vrsqrt.pop %v1878
      %v2007 = vrsqrt.pop %v1879
      %v2008 = vmul.f32 %v616, %v1880
      %v2009 = vmul.f32 %v618, %v1881
      %v2010 = vmul.f32 %v622, %v1882
      %v2011 = vmul.f32 %v624, %v1883
      %v2012 = vmul.f32 %v628, %v1884
      %v2013 = vmul.f32 %v630, %v1885
      %v2014 = vmul.f32 %v634, %v1886
      %v2015 = vmul.f32 %v636, %v1887
      %v2016 = vmul.f32 %v640, %v1888
      %v2017 = vmul.f32 %v642, %v1889
      %v2018 = vmul.f32 %v646, %v1890
      %v2019 = vmul.f32 %v648, %v1891
      %v2020 = vmul.f32 %v652, %v1892
      %v2021 = vmul.f32 %v654, %v1893
      %v2022 = vmul.f32 %v658, %v1894
      %v2023 = vmul.f32 %v660, %v1895
      %v2024 = vmul.f32 %v664, %v1896
      %v2025 = vmul.f32 %v666, %v1897
      %v2026 = vmul.f32 %v670, %v1898
      %v2027 = vmul.f32 %v672, %v1899
      %v2028 = vmul.f32 %v676, %v1900
      %v2029 = vmul.f32 %v678, %v1901
      %v2030 = vmul.f32 %v682, %v1902
      %v2031 = vmul.f32 %v684, %v1903
      %v2032 = vmul.f32 %v688, %v1904
      %v2033 = vmul.f32 %v690, %v1905
      %v2034 = vmul.f32 %v694, %v1906
      %v2035 = vmul.f32 %v696, %v1907
      %v2036 = vmul.f32 %v700, %v1908
      %v2037 = vmul.f32 %v702, %v1909
      %v2038 = vmul.f32 %v706, %v1910
      %v2039 = vmul.f32 %v708, %v1911
      %v2040 = vmul.f32 %v712, %v1912
      %v2041 = vmul.f32 %v714, %v1913
      %v2042 = vmul.f32 %v718, %v1914
      %v2043 = vmul.f32 %v720, %v1915
      %v2044 = vmul.f32 %v724, %v1916
      %v2045 = vmul.f32 %v726, %v1917
      %v2046 = vmul.f32 %v730, %v1918
      %v2047 = vmul.f32 %v732, %v1919
      %v2048 = vmul.f32 %v736, %v1920
      %v2049 = vmul.f32 %v738, %v1921
      %v2050 = vmul.f32 %v742, %v1922
      %v2051 = vmul.f32 %v744, %v1923
      %v2052 = vmul.f32 %v748, %v1924
      %v2053 = vmul.f32 %v750, %v1925
      %v2054 = vmul.f32 %v754, %v1926
      %v2055 = vmul.f32 %v756, %v1927
      %v2056 = vmul.f32 %v760, %v1928
      %v2057 = vmul.f32 %v762, %v1929
      %v2058 = vmul.f32 %v766, %v1930
      %v2059 = vmul.f32 %v768, %v1931
      %v2060 = vmul.f32 %v772, %v1932
      %v2061 = vmul.f32 %v774, %v1933
      %v2062 = vmul.f32 %v778, %v1934
      %v2063 = vmul.f32 %v780, %v1935
      %v2064 = vmul.f32 %v784, %v1936
      %v2065 = vmul.f32 %v786, %v1937
      %v2066 = vmul.f32 %v790, %v1938
      %v2067 = vmul.f32 %v792, %v1939
      %v2068 = vmul.f32 %v796, %v1940
      %v2069 = vmul.f32 %v798, %v1941
      %v2070 = vmul.f32 %v802, %v1942
      %v2071 = vmul.f32 %v804, %v1943
      %v2072 = vmul.f32 %v808, %v1944
      %v2073 = vmul.f32 %v810, %v1945
      %v2074 = vmul.f32 %v814, %v1946
      %v2075 = vmul.f32 %v816, %v1947
      %v2076 = vmul.f32 %v820, %v1948
      %v2077 = vmul.f32 %v822, %v1949
      %v2078 = vmul.f32 %v826, %v1950
      %v2079 = vmul.f32 %v828, %v1951
      %v2080 = vmul.f32 %v832, %v1952
      %v2081 = vmul.f32 %v834, %v1953
      %v2082 = vmul.f32 %v838, %v1954
      %v2083 = vmul.f32 %v840, %v1955
      %v2084 = vmul.f32 %v844, %v1956
      %v2085 = vmul.f32 %v846, %v1957
      %v2086 = vmul.f32 %v850, %v1958
      %v2087 = vmul.f32 %v852, %v1959
      %v2088 = vmul.f32 %v856, %v1960
      %v2089 = vmul.f32 %v858, %v1961
      %v2090 = vmul.f32 %v862, %v1962
      %v2091 = vmul.f32 %v864, %v1963
      %v2092 = vmul.f32 %v868, %v1964
      %v2093 = vmul.f32 %v870, %v1965
      %v2094 = vmul.f32 %v874, %v1966
      %v2095 = vmul.f32 %v876, %v1967
      %v2096 = vmul.f32 %v880, %v1968
      %v2097 = vmul.f32 %v882, %v1969
      %v2098 = vmul.f32 %v886, %v1970
      %v2099 = vmul.f32 %v888, %v1971
      %v2100 = vmul.f32 %v892, %v1972
      %v2101 = vmul.f32 %v894, %v1973
      %v2102 = vmul.f32 %v898, %v1974
      %v2103 = vmul.f32 %v900, %v1975
      %v2104 = vmul.f32 %v904, %v1976
      %v2105 = vmul.f32 %v906, %v1977
      %v2106 = vmul.f32 %v910, %v1978
      %v2107 = vmul.f32 %v912, %v1979
      %v2108 = vmul.f32 %v916, %v1980
      %v2109 = vmul.f32 %v918, %v1981
      %v2110 = vmul.f32 %v922, %v1982
      %v2111 = vmul.f32 %v924, %v1983
      %v2112 = vmul.f32 %v928, %v1984
      %v2113 = vmul.f32 %v930, %v1985
      %v2114 = vmul.f32 %v934, %v1986
      %v2115 = vmul.f32 %v936, %v1987
      %v2116 = vmul.f32 %v940, %v1988
      %v2117 = vmul.f32 %v942, %v1989
      %v2118 = vmul.f32 %v946, %v1990
      %v2119 = vmul.f32 %v948, %v1991
      %v2120 = vmul.f32 %v952, %v1992
      %v2121 = vmul.f32 %v954, %v1993
      %v2122 = vmul.f32 %v958, %v1994
      %v2123 = vmul.f32 %v960, %v1995
      %v2124 = vmul.f32 %v964, %v1996
      %v2125 = vmul.f32 %v966, %v1997
      %v2126 = vmul.f32 %v970, %v1998
      %v2127 = vmul.f32 %v972, %v1999
      %v2128 = vmul.f32 %v976, %v2000
      %v2129 = vmul.f32 %v978, %v2001
      %v2130 = vmul.f32 %v982, %v2002
      %v2131 = vmul.f32 %v984, %v2003
      %v2132 = vmul.f32 %v988, %v2004
      %v2133 = vmul.f32 %v990, %v2005
      %v2134 = vmul.f32 %v994, %v2006
      %v2135 = vmul.f32 %v996, %v2007
      %2136 = vst [vmem:[%s163] sm:$0xff] %v2008
      %2137 = vst [vmem:[%s163 + $0x8] sm:$0xff] %v2009
      %2138 = vst [vmem:[%s163 + $0x10] sm:$0xff] %v2010
      %2139 = vst [vmem:[%s163 + $0x18] sm:$0xff] %v2011
      %2140 = vst [vmem:[%s163 + $0x20] sm:$0xff] %v2012
      %2141 = vst [vmem:[%s163 + $0x28] sm:$0xff] %v2013
      %2142 = vst [vmem:[%s163 + $0x30] sm:$0xff] %v2014
      %2143 = vst [vmem:[%s163 + $0x38] sm:$0xff] %v2015
      %2144 = vst [vmem:[%s163 + $0x40] sm:$0xff] %v2016
      %2145 = vst [vmem:[%s163 + $0x48] sm:$0xff] %v2017
      %2146 = vst [vmem:[%s163 + $0x50] sm:$0xff] %v2018
      %2147 = vst [vmem:[%s163 + $0x58] sm:$0xff] %v2019
      %2148 = vst [vmem:[%s163 + $0x60] sm:$0xff] %v2020
      %2149 = vst [vmem:[%s163 + $0x68] sm:$0xff] %v2021
      %2150 = vst [vmem:[%s163 + $0x70] sm:$0xff] %v2022
      %2151 = vst [vmem:[%s163 + $0x78] sm:$0xff] %v2023
      %2152 = vst [vmem:[%s163 + $0x80] sm:$0xff] %v2024
      %2153 = vst [vmem:[%s163 + $0x88] sm:$0xff] %v2025
      %2154 = vst [vmem:[%s163 + $0x90] sm:$0xff] %v2026
      %2155 = vst [vmem:[%s163 + $0x98] sm:$0xff] %v2027
      %2156 = vst [vmem:[%s163 + $0xa0] sm:$0xff] %v2028
      %2157 = vst [vmem:[%s163 + $0xa8] sm:$0xff] %v2029
      %2158 = vst [vmem:[%s163 + $0xb0] sm:$0xff] %v2030
      %2159 = vst [vmem:[%s163 + $0xb8] sm:$0xff] %v2031
      %2160 = vst [vmem:[%s163 + $0xc0] sm:$0xff] %v2032
      %2161 = vst [vmem:[%s163 + $0xc8] sm:$0xff] %v2033
      %2162 = vst [vmem:[%s163 + $0xd0] sm:$0xff] %v2034
      %2163 = vst [vmem:[%s163 + $0xd8] sm:$0xff] %v2035
      %2164 = vst [vmem:[%s163 + $0xe0] sm:$0xff] %v2036
      %2165 = vst [vmem:[%s163 + $0xe8] sm:$0xff] %v2037
      %2166 = vst [vmem:[%s163 + $0xf0] sm:$0xff] %v2038
      %2167 = vst [vmem:[%s163 + $0xf8] sm:$0xff] %v2039
      %2168 = vst [vmem:[%s163 + $0x100] sm:$0xff] %v2040
      %2169 = vst [vmem:[%s163 + $0x108] sm:$0xff] %v2041
      %2170 = vst [vmem:[%s163 + $0x110] sm:$0xff] %v2042
      %2171 = vst [vmem:[%s163 + $0x118] sm:$0xff] %v2043
      %2172 = vst [vmem:[%s163 + $0x120] sm:$0xff] %v2044
      %2173 = vst [vmem:[%s163 + $0x128] sm:$0xff] %v2045
      %2174 = vst [vmem:[%s163 + $0x130] sm:$0xff] %v2046
      %2175 = vst [vmem:[%s163 + $0x138] sm:$0xff] %v2047
      %2176 = vst [vmem:[%s163 + $0x140] sm:$0xff] %v2048
      %2177 = vst [vmem:[%s163 + $0x148] sm:$0xff] %v2049
      %2178 = vst [vmem:[%s163 + $0x150] sm:$0xff] %v2050
      %2179 = vst [vmem:[%s163 + $0x158] sm:$0xff] %v2051
      %2180 = vst [vmem:[%s163 + $0x160] sm:$0xff] %v2052
      %2181 = vst [vmem:[%s163 + $0x168] sm:$0xff] %v2053
      %2182 = vst [vmem:[%s163 + $0x170] sm:$0xff] %v2054
      %2183 = vst [vmem:[%s163 + $0x178] sm:$0xff] %v2055
      %2184 = vst [vmem:[%s163 + $0x180] sm:$0xff] %v2056
      %2185 = vst [vmem:[%s163 + $0x188] sm:$0xff] %v2057
      %2186 = vst [vmem:[%s163 + $0x190] sm:$0xff] %v2058
      %2187 = vst [vmem:[%s163 + $0x198] sm:$0xff] %v2059
      %2188 = vst [vmem:[%s163 + $0x1a0] sm:$0xff] %v2060
      %2189 = vst [vmem:[%s163 + $0x1a8] sm:$0xff] %v2061
      %2190 = vst [vmem:[%s163 + $0x1b0] sm:$0xff] %v2062
      %2191 = vst [vmem:[%s163 + $0x1b8] sm:$0xff] %v2063
      %2192 = vst [vmem:[%s163 + $0x1c0] sm:$0xff] %v2064
      %2193 = vst [vmem:[%s163 + $0x1c8] sm:$0xff] %v2065
      %2194 = vst [vmem:[%s163 + $0x1d0] sm:$0xff] %v2066
      %2195 = vst [vmem:[%s163 + $0x1d8] sm:$0xff] %v2067
      %2196 = vst [vmem:[%s163 + $0x1e0] sm:$0xff] %v2068
      %2197 = vst [vmem:[%s163 + $0x1e8] sm:$0xff] %v2069
      %2198 = vst [vmem:[%s163 + $0x1f0] sm:$0xff] %v2070
      %2199 = vst [vmem:[%s163 + $0x1f8] sm:$0xff] %v2071
      %2200 = vst [vmem:[%s163 + $0x200] sm:$0xff] %v2072
      %2201 = vst [vmem:[%s163 + $0x208] sm:$0xff] %v2073
      %2202 = vst [vmem:[%s163 + $0x210] sm:$0xff] %v2074
      %2203 = vst [vmem:[%s163 + $0x218] sm:$0xff] %v2075
      %2204 = vst [vmem:[%s163 + $0x220] sm:$0xff] %v2076
      %2205 = vst [vmem:[%s163 + $0x228] sm:$0xff] %v2077
      %2206 = vst [vmem:[%s163 + $0x230] sm:$0xff] %v2078
      %2207 = vst [vmem:[%s163 + $0x238] sm:$0xff] %v2079
      %2208 = vst [vmem:[%s163 + $0x240] sm:$0xff] %v2080
      %2209 = vst [vmem:[%s163 + $0x248] sm:$0xff] %v2081
      %2210 = vst [vmem:[%s163 + $0x250] sm:$0xff] %v2082
      %2211 = vst [vmem:[%s163 + $0x258] sm:$0xff] %v2083
      %2212 = vst [vmem:[%s163 + $0x260] sm:$0xff] %v2084
      %2213 = vst [vmem:[%s163 + $0x268] sm:$0xff] %v2085
      %2214 = vst [vmem:[%s163 + $0x270] sm:$0xff] %v2086
      %2215 = vst [vmem:[%s163 + $0x278] sm:$0xff] %v2087
      %2216 = vst [vmem:[%s163 + $0x280] sm:$0xff] %v2088
      %2217 = vst [vmem:[%s163 + $0x288] sm:$0xff] %v2089
      %2218 = vst [vmem:[%s163 + $0x290] sm:$0xff] %v2090
      %2219 = vst [vmem:[%s163 + $0x298] sm:$0xff] %v2091
      %2220 = vst [vmem:[%s163 + $0x2a0] sm:$0xff] %v2092
      %2221 = vst [vmem:[%s163 + $0x2a8] sm:$0xff] %v2093
      %2222 = vst [vmem:[%s163 + $0x2b0] sm:$0xff] %v2094
      %2223 = vst [vmem:[%s163 + $0x2b8] sm:$0xff] %v2095
      %2224 = vst [vmem:[%s163 + $0x2c0] sm:$0xff] %v2096
      %2225 = vst [vmem:[%s163 + $0x2c8] sm:$0xff] %v2097
      %2226 = vst [vmem:[%s163 + $0x2d0] sm:$0xff] %v2098
      %2227 = vst [vmem:[%s163 + $0x2d8] sm:$0xff] %v2099
      %2228 = vst [vmem:[%s163 + $0x2e0] sm:$0xff] %v2100
      %2229 = vst [vmem:[%s163 + $0x2e8] sm:$0xff] %v2101
      %2230 = vst [vmem:[%s163 + $0x2f0] sm:$0xff] %v2102
      %2231 = vst [vmem:[%s163 + $0x2f8] sm:$0xff] %v2103
      %2232 = vst [vmem:[%s163 + $0x300] sm:$0xff] %v2104
      %2233 = vst [vmem:[%s163 + $0x308] sm:$0xff] %v2105
      %2234 = vst [vmem:[%s163 + $0x310] sm:$0xff] %v2106
      %2235 = vst [vmem:[%s163 + $0x318] sm:$0xff] %v2107
      %2236 = vst [vmem:[%s163 + $0x320] sm:$0xff] %v2108
      %2237 = vst [vmem:[%s163 + $0x328] sm:$0xff] %v2109
      %2238 = vst [vmem:[%s163 + $0x330] sm:$0xff] %v2110
      %2239 = vst [vmem:[%s163 + $0x338] sm:$0xff] %v2111
      %2240 = vst [vmem:[%s163 + $0x340] sm:$0xff] %v2112
      %2241 = vst [vmem:[%s163 + $0x348] sm:$0xff] %v2113
      %2242 = vst [vmem:[%s163 + $0x350] sm:$0xff] %v2114
      %2243 = vst [vmem:[%s163 + $0x358] sm:$0xff] %v2115
      %2244 = vst [vmem:[%s163 + $0x360] sm:$0xff] %v2116
      %2245 = vst [vmem:[%s163 + $0x368] sm:$0xff] %v2117
      %2246 = vst [vmem:[%s163 + $0x370] sm:$0xff] %v2118
      %2247 = vst [vmem:[%s163 + $0x378] sm:$0xff] %v2119
      %2248 = vst [vmem:[%s163 + $0x380] sm:$0xff] %v2120
      %2249 = vst [vmem:[%s163 + $0x388] sm:$0xff] %v2121
      %2250 = vst [vmem:[%s163 + $0x390] sm:$0xff] %v2122
      %2251 = vst [vmem:[%s163 + $0x398] sm:$0xff] %v2123
      %2252 = vst [vmem:[%s163 + $0x3a0] sm:$0xff] %v2124
      %2253 = vst [vmem:[%s163 + $0x3a8] sm:$0xff] %v2125
      %2254 = vst [vmem:[%s163 + $0x3b0] sm:$0xff] %v2126
      %2255 = vst [vmem:[%s163 + $0x3b8] sm:$0xff] %v2127
      %2256 = vst [vmem:[%s163 + $0x3c0] sm:$0xff] %v2128
      %2257 = vst [vmem:[%s163 + $0x3c8] sm:$0xff] %v2129
      %2258 = vst [vmem:[%s163 + $0x3d0] sm:$0xff] %v2130
      %2259 = vst [vmem:[%s163 + $0x3d8] sm:$0xff] %v2131
      %2260 = vst [vmem:[%s163 + $0x3e0] sm:$0xff] %v2132
      %2261 = vst [vmem:[%s163 + $0x3e8] sm:$0xff] %v2133
      %2262 = vst [vmem:[%s163 + $0x3f0] sm:$0xff] %v2134
      %2263 = vst [vmem:[%s163 + $0x3f8] sm:$0xff] %v2135
      %p2264 = scmp.lt.s32.totalorder %s13, 1
      %s2265 = scalar_select %p2264, %s13, 1
      %s2266 = smul.addr %s2265, 128
      %s2267 = smul.addr %s2266, 8
      %s2268 = scalar_lea.vmem %s2, %s2267
      // Predicated region
      $region29: #{_gather_and_sim.1} parent=27 // pred_check
        %p2269 = pneg %p83
      $region30: #{_gather_and_sim.1} parent=27 // pred_check_branch
        %2271 = sbr.rel (%p2269) target = $region32
      $region31: #{_gather_and_sim.1} parent=27 // pred_region
        _
      $region32: #{_gather_and_sim.1} parent=27 // pred_fallthru
        _
    $region28: #{_gather_and_sim.1} parent=5 // pred_fallthru
      _
    %p2272 = scmp.le.s32.totalorder 2, %s8
    // Predicated region
    $region33: #{_gather_and_sim.1} parent=5 // pred_check
      %p2273 = pneg %p2272
    $region34: #{_gather_and_sim.1} parent=5 // pred_check_branch
      %2275 = sbr.rel (%p2273) target = $region36
    $region35: #{_gather_and_sim.1} parent=5 // pred_region
      %s2276 = ssub.s32 %s8, 2
      // Predicated region
      $region37: #{_gather_and_sim.1} parent=35 // pred_check
        %p2277 = pneg %p89
      $region38: #{_gather_and_sim.1} parent=35 // pred_check_branch
        %2279 = sbr.rel (%p2277) target = $region40
      $region39: #{_gather_and_sim.1} parent=35 // pred_region
        %p2280 = scmp.lt.s32.totalorder %s14, 1
        %s2281 = scalar_select %p2280, %s14, 1
        %s2282 = smul.addr %s2281, 128
        %s2283 = smul.addr %s2282, 8
        %s2284 = scalar_lea.vmem %s2, %s2283
      $region40: #{_gather_and_sim.1} parent=35 // pred_fallthru
        _
    $region36: #{_gather_and_sim.1} parent=5 // pred_fallthru
      _
  $region6: #{_gather_and_sim.1} parent=0 // loop_footer
    %s12 = sadd.s32 1, %s8
  $region7: #{_gather_and_sim.1} parent=0 // loop_footer_branch
    %7 = sbr.rel target = $region3
  $region8: #{_gather_and_sim.1} parent=0 // loop_exit
    _

</llo_original>
